<compile_context>
chip_gen: v5e
topology: v5e:2x2
jax: 0.10.0
libtpu: 0.0.40
codegen_flags: <defaults>
</compile_context>

<pallas_src>
import functools

import jax
import jax.numpy as jnp
from jax.experimental import pallas as pl
from jax.experimental.pallas import tpu as pltpu

_SQRT2_INV = 0.7071067811865476
_BN_EPS = 1e-5


# ----------------------------- in-kernel math ------------------------------

def _erf(x):
    # Abramowitz & Stegun 7.1.26, |error| < 1.5e-7 (approx reciprocal adds ~1e-3).
    a1, a2, a3, a4, a5 = (0.254829592, -0.284496736, 1.421413741,
                          -1.453152027, 1.061405429)
    p = 0.3275911
    sign = jnp.where(x >= 0.0, 1.0, -1.0)
    ax = jnp.abs(x)
    t = pl.reciprocal(1.0 + p * ax, approx=True)      # EUP slot, frees the VALU
    poly = ((((a5 * t + a4) * t + a3) * t + a2) * t + a1) * t
    return sign * (1.0 - poly * jnp.exp(-ax * ax))


def _gelu_exact(x):
    return 0.5 * x * (1.0 + _erf(x * _SQRT2_INV))


# ------------------------------- kernels -----------------------------------

def front_kernel(p2_ref, p3_ref, x1_ref, x4_ref,
                 w2_ref, b2_ref, w3_ref, b3_ref,
                 wfc1_ref, wfc2_ref, wfc3_ref, bfc_ref,
                 o_ref):
    """asp + asp1 + fc(cat([maxpool, asp*asp1, avgpool])) for one (image, lane) tile.

    Channels on sublanes, flattened output spatial on lanes (lane-dense stores).
    The concat is replaced by three accumulating GEMMs against the pre-split fc
    weight (no in-kernel concat copy).
    """
    f32 = jnp.float32
    x2 = jnp.dot(w2_ref[...], p2_ref[0], preferred_element_type=f32) + b2_ref[...]
    x3 = jnp.dot(w3_ref[...], p3_ref[0], preferred_element_type=f32) + b3_ref[...]
    acc = jnp.dot(wfc1_ref[...], x1_ref[0], preferred_element_type=f32)
    acc = acc + jnp.dot(wfc2_ref[...], x2 * x3, preferred_element_type=f32)
    acc = acc + jnp.dot(wfc3_ref[...], x4_ref[0], preferred_element_type=f32)
    o_ref[0] = acc + bfc_ref[...]


def double_conv_kernel(prev_ref, cur_ref, next_ref,
                       w1_ref, b1_ref, w2_ref, b2_ref,
                       o_ref, ext_ref, h1g_ref,
                       *, d, tr, nr, cin, cmid, cout):
    """Fused DoubleConv ((3x3 conv -> folded BN -> GELU) x 2) for one row block.

    Activations are (channels, rows*d) with flattened spatial on lanes.  Each stage
    builds a zero-guarded halo slab, takes 9 full-width lane-shifted taps (column
    masks emulate the padding), stacks them into a (9*C, lanes) im2col slab and does
    a single K=9*C GEMM; the output is written once (no partial-lane RMW).
    """
    f32 = jnp.float32
    r = pl.program_id(1)
    s_blk = tr * d                      # lanes in one row block
    l1 = (tr + 2) * d                   # stage-1 output lanes (block rows +- 1)
    l2 = s_blk                          # stage-2 output lanes

    top_keep = (r > 0).astype(f32)      # 0 -> rows above the block are image padding
    bot_keep = (r < nr - 1).astype(f32)  # 0 -> rows below the block are image padding

    # Zero-guarded input slab covering image rows [R0-3, R0+tr+3); outer guard rows
    # are always zero (their reads are masked anyway, zeroing avoids NaN * 0).
    ext_ref[:, 0:d] = jnp.zeros((cin, d), f32)
    ext_ref[:, d:3 * d] = prev_ref[0][:, s_blk - 2 * d:] * top_keep
    ext_ref[:, 3 * d:3 * d + s_blk] = cur_ref[0]
    ext_ref[:, 3 * d + s_blk:5 * d + s_blk] = next_ref[0][:, :2 * d] * bot_keep
    ext_ref[:, 5 * d + s_blk:6 * d + s_blk] = jnp.zeros((cin, d), f32)

    # Column masks emulating the width-1 zero padding (generated in-kernel).
    col = jax.lax.broadcasted_iota(jnp.int32, (1, l1), 1) % d
    m_l = (col != 0).astype(f32)
    m_r = (col != d - 1).astype(f32)

    def conv3x3(src, w_ref_, n_out):
        # src: (c_src, n_out + 4*d) slab; output lane p reads src lanes around p + 2*d.
        taps = []
        for oi in (-1, 0, 1):
            for oj in (-1, 0, 1):
                s = 2 * d + oi * d + oj
                t = src[:, s:s + n_out]
                if oj == 1:
                    t = t * m_r[:, :n_out]
                elif oj == -1:
                    t = t * m_l[:, :n_out]
                taps.append(t)
        p = jnp.concatenate(taps, axis=0)               # (9*c_src, n_out) im2col slab
        return jnp.dot(w_ref_[...], p, preferred_element_type=f32)

    # Stage 1 over image rows [R0-1, R0+tr+1): one extra row each side feeds stage 2.
    h1 = _gelu_exact(conv3x3(ext_ref[...], w1_ref, l1) + b1_ref[...])

    # Re-guard: rows outside the image must be exact zeros (stage-2 zero padding).
    h1g_ref[:, 0:d] = jnp.zeros((cmid, d), f32)
    h1g_ref[:, d:2 * d] = h1[:, :d] * top_keep
    h1g_ref[:, 2 * d:l1] = h1[:, d:l1 - d]
    h1g_ref[:, l1:l1 + d] = h1[:, l1 - d:] * bot_keep
    h1g_ref[:, l1 + d:l1 + 2 * d] = jnp.zeros((cmid, d), f32)

    o_ref[0] = _gelu_exact(conv3x3(h1g_ref[...], w2_ref, l2) + b2_ref[...])


# --------------------------- tiling / VMEM budget ----------------------------

def _vmem_caps():
    """(per-step data budget, scoped vmem limit) derived from the chip's VMEM."""
    try:
        cap = int(pltpu.get_tpu_info().vmem_capacity_bytes)
    except Exception:                    # conservative default: v7x-sized (64 MiB)
        cap = 64 * 2 ** 20
    return cap // 2, (cap * 3) // 4


def _pick_lane_tile(sq, max_tile, bytes_per_lane, budget):
    """Largest multiple-of-128 divisor of sq that is <= max_tile and fits budget."""
    if sq % 128 != 0:
        return sq                        # tiny / odd spatial: whole-extent block
    best = 128
    t = 128
    while t <= min(sq, max_tile):
        if sq % t == 0 and t * bytes_per_lane <= budget:
            best = t
        t += 128
    return best


def _dc_footprint_bytes(tr, d, cin, cmid, cout):
    lane4 = lambda rows: 4 * rows * d
    io = 3 * 2 * cin * lane4(tr) + 2 * cout * lane4(tr)          # double-buffered blocks
    tmp = (cin * lane4(tr + 6) + 9 * cin * lane4(tr + 2)          # ext + stage-1 im2col
           + 2 * cmid * lane4(tr + 4) + 9 * cmid * lane4(tr)      # h1/h1g + stage-2 im2col
           + cout * lane4(tr))
    w = 4 * (9 * cin * cmid + 9 * cmid * cout + cmid + cout)
    return io + tmp + w


def _pick_row_tile(d, cin, cmid, cout, budget):
    cands = [t for t in range(2, d)
             if d % t == 0 and (t * d) % 128 == 0
             and _dc_footprint_bytes(t, d, cin, cmid, cout) <= budget]
    return max(cands) if cands else d    # fall back to whole image per step


# ------------------------------ glue (JAX) ----------------------------------

def down2_forward(x, params):
    """x: (N, C, H, W) NCHW float32.  Returns (N, Cout, H//2, W//2) NCHW."""
    N, C, H, W = x.shape
    assert H == W, "Down2 requires square inputs (x.transpose(2,3) path)"
    assert H % 2 == 0 and H >= 4
    d = H // 2                           # dilation = size // 2 with size == H
    sq = d * d
    cmid = params["w_dc1"].shape[0]
    cout = params["w_dc2"].shape[0]
    assert params["w_dc1"].shape[1] == 9 * C

    budget, vmem_limit = _vmem_caps()
    x = x.astype(jnp.float32)

    # ---- operand packing (one XLA relayout pass per operand). ----
    # TODO(synk): the stride-2 pooling / transposed-quadrant gathers are not
    # expressible as plain BlockSpec tiles; they stay as XLA relayouts (p3 could be
    # derived from p2 with an in-kernel XLU transpose to drop one of them).
    xr = x.reshape(N, C, 2, d, 2, d)
    p2 = xr.transpose(0, 2, 4, 1, 3, 5).reshape(N, 4 * C, sq)    # asp taps (quadrants)
    p3 = xr.transpose(0, 4, 2, 1, 5, 3).reshape(N, 4 * C, sq)    # asp1 taps (of x^T)
    xp = x.reshape(N, C, d, 2, d, 2)
    x1 = xp.max(axis=(3, 5)).reshape(N, C, sq)                   # MaxPool2d(2)
    x4 = xp.mean(axis=(3, 5)).reshape(N, C, sq)                  # aspp = AvgPool2d(2)

    # ~27 C-rows of f32 live per lane column in the front kernel (2x-buffered
    # streams + temporaries); pick the lane tile from the generation's VMEM budget.
    ts = _pick_lane_tile(sq, 8192, 4 * 27 * C, budget)
    ns = sq // ts

    front_cost = pl.CostEstimate(
        flops=int(22 * N * sq * C * C),
        transcendentals=0,
        bytes_accessed=int(4 * (11 * N * C * sq + 11 * C * C + 4 * C)),
    )
    y0 = pl.pallas_call(
        front_kernel,
        out_shape=jax.ShapeDtypeStruct((N, C, sq), jnp.float32),
        grid=(N, ns),
        in_specs=[
            pl.BlockSpec((1, 4 * C, ts), lambda n, s: (n, 0, s)),
            pl.BlockSpec((1, 4 * C, ts), lambda n, s: (n, 0, s)),
            pl.BlockSpec((1, C, ts), lambda n, s: (n, 0, s)),
            pl.BlockSpec((1, C, ts), lambda n, s: (n, 0, s)),
            pl.BlockSpec((C, 4 * C), lambda n, s: (0, 0)),
            pl.BlockSpec((C, 1), lambda n, s: (0, 0)),
            pl.BlockSpec((C, 4 * C), lambda n, s: (0, 0)),
            pl.BlockSpec((C, 1), lambda n, s: (0, 0)),
            pl.BlockSpec((C, C), lambda n, s: (0, 0)),
            pl.BlockSpec((C, C), lambda n, s: (0, 0)),
            pl.BlockSpec((C, C), lambda n, s: (0, 0)),
            pl.BlockSpec((C, 1), lambda n, s: (0, 0)),
        ],
        out_specs=pl.BlockSpec((1, C, ts), lambda n, s: (n, 0, s)),
        compiler_params=pltpu.CompilerParams(
            dimension_semantics=("parallel", "parallel"),
            vmem_limit_bytes=int(vmem_limit)),
        cost_estimate=front_cost,
    )(p2, p3, x1, x4,
      params["w_asp"], params["b_asp"], params["w_asp1"], params["b_asp1"],
      params["w_fc1"], params["w_fc2"], params["w_fc3"], params["b_fc"])

    # DoubleConv: (N, row-block) grid with a 2-row halo via clamped prev/cur/next
    # streams.  TODO(synk): the halo currently re-streams full neighbour blocks
    # (3x y0 reads); a dedicated 8-row halo stream would trim that.
    tr = _pick_row_tile(d, C, cmid, cout, budget)
    nr = d // tr

    dc_cost = pl.CostEstimate(
        flops=int(2 * 9 * N * sq * (cmid * C + cout * cmid)),
        transcendentals=int(2 * N * sq * (cmid + cout)),
        bytes_accessed=int(4 * (N * sq * (3 * C + cout)
                                + 9 * (cmid * C + cout * cmid) + cmid + cout)),
    )
    y = pl.pallas_call(
        functools.partial(double_conv_kernel, d=d, tr=tr, nr=nr,
                          cin=C, cmid=cmid, cout=cout),
        out_shape=jax.ShapeDtypeStruct((N, cout, sq), jnp.float32),
        grid=(N, nr),
        in_specs=[
            pl.BlockSpec((1, C, tr * d), lambda n, r: (n, 0, jnp.maximum(r - 1, 0))),
            pl.BlockSpec((1, C, tr * d), lambda n, r: (n, 0, r)),
            pl.BlockSpec((1, C, tr * d), lambda n, r: (n, 0, jnp.minimum(r + 1, nr - 1))),
            pl.BlockSpec((cmid, 9 * C), lambda n, r: (0, 0)),
            pl.BlockSpec((cmid, 1), lambda n, r: (0, 0)),
            pl.BlockSpec((cout, 9 * cmid), lambda n, r: (0, 0)),
            pl.BlockSpec((cout, 1), lambda n, r: (0, 0)),
        ],
        out_specs=pl.BlockSpec((1, cout, tr * d), lambda n, r: (n, 0, r)),
        scratch_shapes=[pltpu.VMEM((C, (tr + 6) * d), jnp.float32),
                        pltpu.VMEM((cmid, (tr + 4) * d), jnp.float32)],
        compiler_params=pltpu.CompilerParams(
            dimension_semantics=("parallel", "parallel"),
            vmem_limit_bytes=int(vmem_limit)),
        cost_estimate=dc_cost,
    )(y0, y0, y0,
      params["w_dc1"], params["b_dc1"], params["w_dc2"], params["b_dc2"])

    return y.reshape(N, cout, d, d)                              # NCHW


# ---------------------------- parameters ------------------------------------

def init_raw_params(key, c_in, c_out):
    """PyTorch-layout parameters (Conv2d weights (Co, Ci, kh, kw), etc.)."""
    ks = jax.random.split(key, 12)

    def nrm(k, shape, scale=0.1):
        return scale * jax.random.normal(k, shape, dtype=jnp.float32)

    return {
        "w_asp": nrm(ks[0], (c_in, c_in, 2, 2)),
        "b_asp": nrm(ks[1], (c_in,)),
        "w_asp1": nrm(ks[2], (c_in, c_in, 2, 2)),
        "b_asp1": nrm(ks[3], (c_in,)),
        "w_fc": nrm(ks[4], (c_in, 3 * c_in, 1, 1)),
        "b_fc": nrm(ks[5], (c_in,)),
        "w_dc1": nrm(ks[6], (c_out, c_in, 3, 3)),      # mid_channels == out_channels
        "w_dc2": nrm(ks[7], (c_out, c_out, 3, 3)),
        "bn1_gamma": 1.0 + nrm(ks[8], (c_out,)),
        "bn1_beta": nrm(ks[9], (c_out,)),
        "bn1_mean": jnp.zeros((c_out,), jnp.float32),  # eval-mode running stats
        "bn1_var": jnp.ones((c_out,), jnp.float32),
        "bn2_gamma": 1.0 + nrm(ks[10], (c_out,)),
        "bn2_beta": nrm(ks[11], (c_out,)),
        "bn2_mean": jnp.zeros((c_out,), jnp.float32),
        "bn2_var": jnp.ones((c_out,), jnp.float32),
    }


def prepare_params(raw, c_in, c_out):
    """Fold eval-mode BatchNorm into the conv weights and pack for the GEMM layout."""
    def fold_bn(g, b, m, v):
        scale = g / jnp.sqrt(v + _BN_EPS)
        return scale, b - m * scale

    def pack_k2(w):                       # (Co, Ci, 2, 2) -> (Co, 4*Ci), tap-major K
        return jnp.transpose(w, (0, 2, 3, 1)).reshape(w.shape[0], 4 * w.shape[1])

    def pack_k3(w, scale):                # (Co, Ci, 3, 3) -> (Co, 9*Ci), BN folded
        w = w * scale[:, None, None, None]
        return jnp.transpose(w, (0, 2, 3, 1)).reshape(w.shape[0], 9 * w.shape[1])

    s1, bias1 = fold_bn(raw["bn1_gamma"], raw["bn1_beta"], raw["bn1_mean"], raw["bn1_var"])
    s2, bias2 = fold_bn(raw["bn2_gamma"], raw["bn2_beta"], raw["bn2_mean"], raw["bn2_var"])
    wfc = raw["w_fc"].reshape(c_in, 3 * c_in)
    return {
        "w_asp": pack_k2(raw["w_asp"]),
        "b_asp": raw["b_asp"].reshape(c_in, 1),
        "w_asp1": pack_k2(raw["w_asp1"]),
        "b_asp1": raw["b_asp1"].reshape(c_in, 1),
        "w_fc1": wfc[:, :c_in],           # cat order: [maxpool, asp*asp1, aspp]
        "w_fc2": wfc[:, c_in:2 * c_in],
        "w_fc3": wfc[:, 2 * c_in:],
        "b_fc": raw["b_fc"].reshape(c_in, 1),
        "w_dc1": pack_k3(raw["w_dc1"], s1),
        "b_dc1": bias1.reshape(c_out, 1),
        "w_dc2": pack_k3(raw["w_dc2"], s2),
        "b_dc2": bias2.reshape(c_out, 1),
    }


# --------------------------------- main --------------------------------------

if __name__ == "__main__":
    # TODO(synk): for tiny channel counts (C=4) the GEMMs are sublane-padded; folding
    # batch into the channel dim would roughly double utilization but is omitted here.
    N, C_in, H, W = 2, 4, 16, 16          # size == H == W, dilation = size // 2 = 8
    C_out = 8

    x = jax.random.normal(jax.random.PRNGKey(0), (N, C_in, H, W), dtype=jnp.float32)
    raw = init_raw_params(jax.random.PRNGKey(1), C_in, C_out)
    params = prepare_params(raw, C_in, C_out)

    y = jax.jit(down2_forward)(x, params)
    jax.block_until_ready(y)

    assert y.shape == (N, C_out, H // 2, W // 2), y.shape
    assert bool(jnp.all(jnp.isfinite(y)))
    print("KERNEL_OK")
</pallas_src>

<mosaic_0001>
module attributes {stable_mosaic.version = 11 : i64} {
  func.func @front_kernel(%arg0: i32, %arg1: i32, %arg2: memref<1x16x64xf32, #tpu.memory_space<vmem>>, %arg3: memref<1x16x64xf32, #tpu.memory_space<vmem>>, %arg4: memref<1x4x64xf32, #tpu.memory_space<vmem>>, %arg5: memref<1x4x64xf32, #tpu.memory_space<vmem>>, %arg6: memref<4x16xf32, #tpu.memory_space<vmem>>, %arg7: memref<4x1xf32, #tpu.memory_space<vmem>>, %arg8: memref<4x16xf32, #tpu.memory_space<vmem>>, %arg9: memref<4x1xf32, #tpu.memory_space<vmem>>, %arg10: memref<4x4xf32, #tpu.memory_space<vmem>>, %arg11: memref<4x4xf32, #tpu.memory_space<vmem>>, %arg12: memref<4x4xf32, #tpu.memory_space<vmem>>, %arg13: memref<4x1xf32, #tpu.memory_space<vmem>>, %arg14: memref<1x4x64xf32, #tpu.memory_space<vmem>>) attributes {dimension_semantics = [#tpu.dimension_semantics<parallel>, #tpu.dimension_semantics<parallel>], iteration_bounds = array<i64: 2, 1>, scalar_prefetch = 0 : i64, scratch_operands = 0 : i64, tpu.core_type = #tpu.core_type<tc>, window_params = [{transform_indices = @transform_0, window_bounds = array<i64: 1, 16, 64>}, {transform_indices = @transform_1, window_bounds = array<i64: 1, 16, 64>}, {transform_indices = @transform_2, window_bounds = array<i64: 1, 4, 64>}, {transform_indices = @transform_3, window_bounds = array<i64: 1, 4, 64>}, {pipeline_mode = #tpu.pipeline_mode<synchronous>, transform_indices = @transform_4, window_bounds = array<i64: 4, 16>}, {pipeline_mode = #tpu.pipeline_mode<synchronous>, transform_indices = @transform_5, window_bounds = array<i64: 4, 1>}, {pipeline_mode = #tpu.pipeline_mode<synchronous>, transform_indices = @transform_6, window_bounds = array<i64: 4, 16>}, {pipeline_mode = #tpu.pipeline_mode<synchronous>, transform_indices = @transform_7, window_bounds = array<i64: 4, 1>}, {pipeline_mode = #tpu.pipeline_mode<synchronous>, transform_indices = @transform_8, window_bounds = array<i64: 4, 4>}, {pipeline_mode = #tpu.pipeline_mode<synchronous>, transform_indices = @transform_9, window_bounds = array<i64: 4, 4>}, {pipeline_mode = #tpu.pipeline_mode<synchronous>, transform_indices = @transform_10, window_bounds = array<i64: 4, 4>}, {pipeline_mode = #tpu.pipeline_mode<synchronous>, transform_indices = @transform_11, window_bounds = array<i64: 4, 1>}, {transform_indices = @transform_12, window_bounds = array<i64: 1, 4, 64>}]} {
    %c0 = arith.constant 0 : index
    %c0_0 = arith.constant 0 : index
    %0 = vector.load %arg6[%c0, %c0_0] : memref<4x16xf32, #tpu.memory_space<vmem>>, vector<4x16xf32>
    %c0_1 = arith.constant 0 : index
    %c0_2 = arith.constant 0 : index
    %c0_3 = arith.constant 0 : index
    %1 = vector.load %arg2[%c0_1, %c0_2, %c0_3] : memref<1x16x64xf32, #tpu.memory_space<vmem>>, vector<1x16x64xf32>
    %2 = vector.shape_cast %1 : vector<1x16x64xf32> to vector<16x64xf32>
    %cst = arith.constant dense<0.000000e+00> : vector<4x64xf32>
    %3 = tpu.matmul %0, %2, %cst {dimension_numbers = #tpu.dot_dimension_numbers<[1], [0], [0], [1], [0, 0, 1, 1], [], []>} : vector<4x16xf32>, vector<16x64xf32>, vector<4x64xf32> -> vector<4x64xf32>
    %c0_4 = arith.constant 0 : index
    %c0_5 = arith.constant 0 : index
    %4 = vector.load %arg7[%c0_4, %c0_5] : memref<4x1xf32, #tpu.memory_space<vmem>>, vector<4x1xf32>
    %5 = vector.broadcast %4 : vector<4x1xf32> to vector<4x64xf32>
    %6 = arith.addf %3, %5 : vector<4x64xf32>
    %c0_6 = arith.constant 0 : index
    %c0_7 = arith.constant 0 : index
    %7 = vector.load %arg8[%c0_6, %c0_7] : memref<4x16xf32, #tpu.memory_space<vmem>>, vector<4x16xf32>
    %c0_8 = arith.constant 0 : index
    %c0_9 = arith.constant 0 : index
    %c0_10 = arith.constant 0 : index
    %8 = vector.load %arg3[%c0_8, %c0_9, %c0_10] : memref<1x16x64xf32, #tpu.memory_space<vmem>>, vector<1x16x64xf32>
    %9 = vector.shape_cast %8 : vector<1x16x64xf32> to vector<16x64xf32>
    %cst_11 = arith.constant dense<0.000000e+00> : vector<4x64xf32>
    %10 = tpu.matmul %7, %9, %cst_11 {dimension_numbers = #tpu.dot_dimension_numbers<[1], [0], [0], [1], [0, 0, 1, 1], [], []>} : vector<4x16xf32>, vector<16x64xf32>, vector<4x64xf32> -> vector<4x64xf32>
    %c0_12 = arith.constant 0 : index
    %c0_13 = arith.constant 0 : index
    %11 = vector.load %arg9[%c0_12, %c0_13] : memref<4x1xf32, #tpu.memory_space<vmem>>, vector<4x1xf32>
    %12 = vector.broadcast %11 : vector<4x1xf32> to vector<4x64xf32>
    %13 = arith.addf %10, %12 : vector<4x64xf32>
    %c0_14 = arith.constant 0 : index
    %c0_15 = arith.constant 0 : index
    %14 = vector.load %arg10[%c0_14, %c0_15] : memref<4x4xf32, #tpu.memory_space<vmem>>, vector<4x4xf32>
    %c0_16 = arith.constant 0 : index
    %c0_17 = arith.constant 0 : index
    %c0_18 = arith.constant 0 : index
    %15 = vector.load %arg4[%c0_16, %c0_17, %c0_18] : memref<1x4x64xf32, #tpu.memory_space<vmem>>, vector<1x4x64xf32>
    %16 = vector.shape_cast %15 : vector<1x4x64xf32> to vector<4x64xf32>
    %cst_19 = arith.constant dense<0.000000e+00> : vector<4x64xf32>
    %17 = tpu.matmul %14, %16, %cst_19 {dimension_numbers = #tpu.dot_dimension_numbers<[1], [0], [0], [1], [0, 0, 1, 1], [], []>} : vector<4x4xf32>, vector<4x64xf32>, vector<4x64xf32> -> vector<4x64xf32>
    %c0_20 = arith.constant 0 : index
    %c0_21 = arith.constant 0 : index
    %18 = vector.load %arg11[%c0_20, %c0_21] : memref<4x4xf32, #tpu.memory_space<vmem>>, vector<4x4xf32>
    %19 = arith.mulf %6, %13 : vector<4x64xf32>
    %cst_22 = arith.constant dense<0.000000e+00> : vector<4x64xf32>
    %20 = tpu.matmul %18, %19, %cst_22 {dimension_numbers = #tpu.dot_dimension_numbers<[1], [0], [0], [1], [0, 0, 1, 1], [], []>} : vector<4x4xf32>, vector<4x64xf32>, vector<4x64xf32> -> vector<4x64xf32>
    %21 = arith.addf %17, %20 : vector<4x64xf32>
    %c0_23 = arith.constant 0 : index
    %c0_24 = arith.constant 0 : index
    %22 = vector.load %arg12[%c0_23, %c0_24] : memref<4x4xf32, #tpu.memory_space<vmem>>, vector<4x4xf32>
    %c0_25 = arith.constant 0 : index
    %c0_26 = arith.constant 0 : index
    %c0_27 = arith.constant 0 : index
    %23 = vector.load %arg5[%c0_25, %c0_26, %c0_27] : memref<1x4x64xf32, #tpu.memory_space<vmem>>, vector<1x4x64xf32>
    %24 = vector.shape_cast %23 : vector<1x4x64xf32> to vector<4x64xf32>
    %cst_28 = arith.constant dense<0.000000e+00> : vector<4x64xf32>
    %25 = tpu.matmul %22, %24, %cst_28 {dimension_numbers = #tpu.dot_dimension_numbers<[1], [0], [0], [1], [0, 0, 1, 1], [], []>} : vector<4x4xf32>, vector<4x64xf32>, vector<4x64xf32> -> vector<4x64xf32>
    %26 = arith.addf %21, %25 : vector<4x64xf32>
    %c0_29 = arith.constant 0 : index
    %c0_30 = arith.constant 0 : index
    %27 = vector.load %arg13[%c0_29, %c0_30] : memref<4x1xf32, #tpu.memory_space<vmem>>, vector<4x1xf32>
    %28 = vector.broadcast %27 : vector<4x1xf32> to vector<4x64xf32>
    %29 = arith.addf %26, %28 : vector<4x64xf32>
    %c0_31 = arith.constant 0 : index
    %c0_32 = arith.constant 0 : index
    %c0_33 = arith.constant 0 : index
    %30 = vector.load %arg14[%c0_31, %c0_32, %c0_33] : memref<1x4x64xf32, #tpu.memory_space<vmem>>, vector<1x4x64xf32>
    %31 = vector.shape_cast %30 : vector<1x4x64xf32> to vector<4x64xf32>
    %32 = vector.shape_cast %29 : vector<4x64xf32> to vector<1x4x64xf32>
    tpu.vector_store %arg14[%c0_31, %c0_32, %c0_33], %32 {strides = array<i32>} : memref<1x4x64xf32, #tpu.memory_space<vmem>>, vector<1x4x64xf32>,
    return
  }
  func.func @transform_0(%arg0: i32, %arg1: i32) -> (i32, i32, i32) {
    %c0_i32 = arith.constant 0 : i32
    %c0_i32_0 = arith.constant 0 : i32
    return %arg0, %c0_i32, %arg1 : i32, i32, i32
  }
  func.func @transform_1(%arg0: i32, %arg1: i32) -> (i32, i32, i32) {
    %c0_i32 = arith.constant 0 : i32
    %c0_i32_0 = arith.constant 0 : i32
    return %arg0, %c0_i32, %arg1 : i32, i32, i32
  }
  func.func @transform_2(%arg0: i32, %arg1: i32) -> (i32, i32, i32) {
    %c0_i32 = arith.constant 0 : i32
    %c0_i32_0 = arith.constant 0 : i32
    return %arg0, %c0_i32, %arg1 : i32, i32, i32
  }
  func.func @transform_3(%arg0: i32, %arg1: i32) -> (i32, i32, i32) {
    %c0_i32 = arith.constant 0 : i32
    %c0_i32_0 = arith.constant 0 : i32
    return %arg0, %c0_i32, %arg1 : i32, i32, i32
  }
  func.func @transform_4(%arg0: i32, %arg1: i32) -> (i32, i32) {
    %c0_i32 = arith.constant 0 : i32
    %c0_i32_0 = arith.constant 0 : i32
    %c0_i32_1 = arith.constant 0 : i32
    return %c0_i32, %c0_i32_0 : i32, i32
  }
  func.func @transform_5(%arg0: i32, %arg1: i32) -> (i32, i32) {
    %c0_i32 = arith.constant 0 : i32
    %c0_i32_0 = arith.constant 0 : i32
    %c0_i32_1 = arith.constant 0 : i32
    return %c0_i32, %c0_i32_0 : i32, i32
  }
  func.func @transform_6(%arg0: i32, %arg1: i32) -> (i32, i32) {
    %c0_i32 = arith.constant 0 : i32
    %c0_i32_0 = arith.constant 0 : i32
    %c0_i32_1 = arith.constant 0 : i32
    return %c0_i32, %c0_i32_0 : i32, i32
  }
  func.func @transform_7(%arg0: i32, %arg1: i32) -> (i32, i32) {
    %c0_i32 = arith.constant 0 : i32
    %c0_i32_0 = arith.constant 0 : i32
    %c0_i32_1 = arith.constant 0 : i32
    return %c0_i32, %c0_i32_0 : i32, i32
  }
  func.func @transform_8(%arg0: i32, %arg1: i32) -> (i32, i32) {
    %c0_i32 = arith.constant 0 : i32
    %c0_i32_0 = arith.constant 0 : i32
    %c0_i32_1 = arith.constant 0 : i32
    return %c0_i32, %c0_i32_0 : i32, i32
  }
  func.func @transform_9(%arg0: i32, %arg1: i32) -> (i32, i32) {
    %c0_i32 = arith.constant 0 : i32
    %c0_i32_0 = arith.constant 0 : i32
    %c0_i32_1 = arith.constant 0 : i32
    return %c0_i32, %c0_i32_0 : i32, i32
  }
  func.func @transform_10(%arg0: i32, %arg1: i32) -> (i32, i32) {
    %c0_i32 = arith.constant 0 : i32
    %c0_i32_0 = arith.constant 0 : i32
    %c0_i32_1 = arith.constant 0 : i32
    return %c0_i32, %c0_i32_0 : i32, i32
  }
  func.func @transform_11(%arg0: i32, %arg1: i32) -> (i32, i32) {
    %c0_i32 = arith.constant 0 : i32
    %c0_i32_0 = arith.constant 0 : i32
    %c0_i32_1 = arith.constant 0 : i32
    return %c0_i32, %c0_i32_0 : i32, i32
  }
  func.func @transform_12(%arg0: i32, %arg1: i32) -> (i32, i32, i32) {
    %c0_i32 = arith.constant 0 : i32
    %c0_i32_0 = arith.constant 0 : i32
    return %arg0, %c0_i32, %arg1 : i32, i32, i32
  }
}

module attributes {stable_mosaic.version = 11 : i64} {
  func.func @double_conv_kernel(%arg0: i32, %arg1: i32, %arg2: memref<1x4x64xf32, #tpu.memory_space<vmem>>, %arg3: memref<1x4x64xf32, #tpu.memory_space<vmem>>, %arg4: memref<1x4x64xf32, #tpu.memory_space<vmem>>, %arg5: memref<8x36xf32, #tpu.memory_space<vmem>>, %arg6: memref<8x1xf32, #tpu.memory_space<vmem>>, %arg7: memref<8x72xf32, #tpu.memory_space<vmem>>, %arg8: memref<8x1xf32, #tpu.memory_space<vmem>>, %arg9: memref<1x8x64xf32, #tpu.memory_space<vmem>>, %arg10: memref<4x112xf32, #tpu.memory_space<vmem>>, %arg11: memref<8x96xf32, #tpu.memory_space<vmem>>) attributes {dimension_semantics = [#tpu.dimension_semantics<parallel>, #tpu.dimension_semantics<parallel>], iteration_bounds = array<i64: 2, 1>, scalar_prefetch = 0 : i64, scratch_operands = 2 : i64, tpu.core_type = #tpu.core_type<tc>, window_params = [{transform_indices = @transform_0, window_bounds = array<i64: 1, 4, 64>}, {transform_indices = @transform_1, window_bounds = array<i64: 1, 4, 64>}, {transform_indices = @transform_2, window_bounds = array<i64: 1, 4, 64>}, {pipeline_mode = #tpu.pipeline_mode<synchronous>, transform_indices = @transform_3, window_bounds = array<i64: 8, 36>}, {pipeline_mode = #tpu.pipeline_mode<synchronous>, transform_indices = @transform_4, window_bounds = array<i64: 8, 1>}, {pipeline_mode = #tpu.pipeline_mode<synchronous>, transform_indices = @transform_5, window_bounds = array<i64: 8, 72>}, {pipeline_mode = #tpu.pipeline_mode<synchronous>, transform_indices = @transform_6, window_bounds = array<i64: 8, 1>}, {transform_indices = @transform_7, window_bounds = array<i64: 1, 8, 64>}]} {
    %c0_i32 = arith.constant 0 : i32
    %0 = arith.cmpi sgt, %arg1, %c0_i32 : i32
    %1 = arith.extui %0 : i1 to i32
    %2 = arith.sitofp %1 : i32 to f32
    %c0_i32_0 = arith.constant 0 : i32
    %3 = arith.cmpi slt, %arg1, %c0_i32_0 : i32
    %4 = arith.extui %3 : i1 to i32
    %5 = arith.sitofp %4 : i32 to f32
    %cst = arith.constant 0.000000e+00 : f32
    %6 = vector.broadcast %cst : f32 to vector<4x8xf32>
    %c0 = arith.constant 0 : index
    %c0_1 = arith.constant 0 : index
    %7 = vector.load %arg10[%c0, %c0_1] : memref<4x112xf32, #tpu.memory_space<vmem>>, vector<4x8xf32>
    tpu.vector_store %arg10[%c0, %c0_1], %6 {strides = array<i32>} : memref<4x112xf32, #tpu.memory_space<vmem>>, vector<4x8xf32>,
    %c0_2 = arith.constant 0 : index
    %c0_3 = arith.constant 0 : index
    %c0_4 = arith.constant 0 : index
    %8 = vector.load %arg2[%c0_2, %c0_3, %c0_4] : memref<1x4x64xf32, #tpu.memory_space<vmem>>, vector<1x4x64xf32>
    %9 = vector.shape_cast %8 : vector<1x4x64xf32> to vector<4x64xf32>
    %10 = vector.extract_strided_slice %9 {offsets = [0, 48], sizes = [4, 16], strides = [1, 1]} : vector<4x64xf32> to vector<4x16xf32>
    %11 = vector.broadcast %2 : f32 to vector<4x16xf32>
    %12 = arith.mulf %10, %11 : vector<4x16xf32>
    %c0_5 = arith.constant 0 : index
    %c8 = arith.constant 8 : index
    %13 = vector.load %arg10[%c0_5, %c8] : memref<4x112xf32, #tpu.memory_space<vmem>>, vector<4x16xf32>
    tpu.vector_store %arg10[%c0_5, %c8], %12 {strides = array<i32>} : memref<4x112xf32, #tpu.memory_space<vmem>>, vector<4x16xf32>,
    %c0_6 = arith.constant 0 : index
    %c0_7 = arith.constant 0 : index
    %c0_8 = arith.constant 0 : index
    %14 = vector.load %arg3[%c0_6, %c0_7, %c0_8] : memref<1x4x64xf32, #tpu.memory_space<vmem>>, vector<1x4x64xf32>
    %15 = vector.shape_cast %14 : vector<1x4x64xf32> to vector<4x64xf32>
    %c0_9 = arith.constant 0 : index
    %c24 = arith.constant 24 : index
    %16 = vector.load %arg10[%c0_9, %c24] : memref<4x112xf32, #tpu.memory_space<vmem>>, vector<4x64xf32>
    tpu.vector_store %arg10[%c0_9, %c24], %15 {strides = array<i32>} : memref<4x112xf32, #tpu.memory_space<vmem>>, vector<4x64xf32>,
    %c0_10 = arith.constant 0 : index
    %c0_11 = arith.constant 0 : index
    %c0_12 = arith.constant 0 : index
    %17 = vector.load %arg4[%c0_10, %c0_11, %c0_12] : memref<1x4x64xf32, #tpu.memory_space<vmem>>, vector<1x4x64xf32>
    %18 = vector.shape_cast %17 : vector<1x4x64xf32> to vector<4x64xf32>
    %19 = vector.extract_strided_slice %18 {offsets = [0, 0], sizes = [4, 16], strides = [1, 1]} : vector<4x64xf32> to vector<4x16xf32>
    %20 = vector.broadcast %5 : f32 to vector<4x16xf32>
    %21 = arith.mulf %19, %20 : vector<4x16xf32>
    %c0_13 = arith.constant 0 : index
    %c88 = arith.constant 88 : index
    %22 = vector.load %arg10[%c0_13, %c88] : memref<4x112xf32, #tpu.memory_space<vmem>>, vector<4x16xf32>
    tpu.vector_store %arg10[%c0_13, %c88], %21 {strides = array<i32>} : memref<4x112xf32, #tpu.memory_space<vmem>>, vector<4x16xf32>,
    %cst_14 = arith.constant 0.000000e+00 : f32
    %23 = vector.broadcast %cst_14 : f32 to vector<4x8xf32>
    %c0_15 = arith.constant 0 : index
    %c104 = arith.constant 104 : index
    %24 = vector.load %arg10[%c0_15, %c104] : memref<4x112xf32, #tpu.memory_space<vmem>>, vector<4x8xf32>
    tpu.vector_store %arg10[%c0_15, %c104], %23 {strides = array<i32>} : memref<4x112xf32, #tpu.memory_space<vmem>>, vector<4x8xf32>,
    %25 = tpu.iota {dimensions = array<i32: 1>} : vector<1x80xi32>
    %c8_i32 = arith.constant 8 : i32
    %c0_i32_16 = arith.constant 0 : i32
    %26 = arith.cmpi eq, %c8_i32, %c0_i32_16 : i32
    %c1_i32 = arith.constant 1 : i32
    %27 = arith.select %26, %c1_i32, %c8_i32 : i32
    %28 = vector.broadcast %27 : i32 to vector<1x80xi32>
    %29 = arith.remsi %25, %28 : vector<1x80xi32>
    %c0_i32_17 = arith.constant 0 : i32
    %30 = vector.broadcast %c0_i32_17 : i32 to vector<1x80xi32>
    %31 = arith.cmpi ne, %29, %30 : vector<1x80xi32>
    %c0_i32_18 = arith.constant 0 : i32
    %32 = vector.broadcast %c0_i32_18 : i32 to vector<1x80xi32>
    %33 = arith.cmpi slt, %29, %32 : vector<1x80xi32>
    %c0_i32_19 = arith.constant 0 : i32
    %34 = arith.cmpi slt, %27, %c0_i32_19 : i32
    %35 = vector.broadcast %34 : i1 to vector<1x80xi1>
    %36 = vector.broadcast %35 : vector<1x80xi1> to vector<1x80xi1>
    %37 = arith.xori %33, %36 : vector<1x80xi1>
    %38 = arith.andi %37, %31 : vector<1x80xi1>
    %39 = vector.broadcast %27 : i32 to vector<1x80xi32>
    %40 = arith.addi %29, %39 : vector<1x80xi32>
    %41 = arith.select %38, %40, %29 : vector<1x80xi1>, vector<1x80xi32>
    %c0_i32_20 = arith.constant 0 : i32
    %42 = vector.broadcast %c0_i32_20 : i32 to vector<1x80xi32>
    %43 = arith.cmpi ne, %41, %42 : vector<1x80xi32>
    %44 = arith.extui %43 : vector<1x80xi1> to vector<1x80xi32>
    %45 = arith.sitofp %44 : vector<1x80xi32> to vector<1x80xf32>
    %c7_i32 = arith.constant 7 : i32
    %46 = vector.broadcast %c7_i32 : i32 to vector<1x80xi32>
    %47 = arith.cmpi ne, %41, %46 : vector<1x80xi32>
    %48 = arith.extui %47 : vector<1x80xi1> to vector<1x80xi32>
    %49 = arith.sitofp %48 : vector<1x80xi32> to vector<1x80xf32>
    %c0_21 = arith.constant 0 : index
    %c0_22 = arith.constant 0 : index
    %50 = vector.load %arg10[%c0_21, %c0_22] : memref<4x112xf32, #tpu.memory_space<vmem>>, vector<4x112xf32>
    %51 = vector.extract_strided_slice %50 {offsets = [0, 7], sizes = [4, 80], strides = [1, 1]} : vector<4x112xf32> to vector<4x80xf32>
    %52 = vector.broadcast %45 : vector<1x80xf32> to vector<4x80xf32>
    %53 = arith.mulf %51, %52 : vector<4x80xf32>
    %54 = vector.extract_strided_slice %50 {offsets = [0, 8], sizes = [4, 80], strides = [1, 1]} : vector<4x112xf32> to vector<4x80xf32>
    %55 = vector.extract_strided_slice %50 {offsets = [0, 9], sizes = [4, 80], strides = [1, 1]} : vector<4x112xf32> to vector<4x80xf32>
    %56 = vector.broadcast %49 : vector<1x80xf32> to vector<4x80xf32>
    %57 = arith.mulf %55, %56 : vector<4x80xf32>
    %58 = vector.extract_strided_slice %50 {offsets = [0, 15], sizes = [4, 80], strides = [1, 1]} : vector<4x112xf32> to vector<4x80xf32>
    %59 = vector.broadcast %45 : vector<1x80xf32> to vector<4x80xf32>
    %60 = arith.mulf %58, %59 : vector<4x80xf32>
    %61 = vector.extract_strided_slice %50 {offsets = [0, 16], sizes = [4, 80], strides = [1, 1]} : vector<4x112xf32> to vector<4x80xf32>
    %62 = vector.extract_strided_slice %50 {offsets = [0, 17], sizes = [4, 80], strides = [1, 1]} : vector<4x112xf32> to vector<4x80xf32>
    %63 = vector.broadcast %49 : vector<1x80xf32> to vector<4x80xf32>
    %64 = arith.mulf %62, %63 : vector<4x80xf32>
    %65 = vector.extract_strided_slice %50 {offsets = [0, 23], sizes = [4, 80], strides = [1, 1]} : vector<4x112xf32> to vector<4x80xf32>
    %66 = vector.broadcast %45 : vector<1x80xf32> to vector<4x80xf32>
    %67 = arith.mulf %65, %66 : vector<4x80xf32>
    %68 = vector.extract_strided_slice %50 {offsets = [0, 24], sizes = [4, 80], strides = [1, 1]} : vector<4x112xf32> to vector<4x80xf32>
    %69 = vector.extract_strided_slice %50 {offsets = [0, 25], sizes = [4, 80], strides = [1, 1]} : vector<4x112xf32> to vector<4x80xf32>
    %70 = vector.broadcast %49 : vector<1x80xf32> to vector<4x80xf32>
    %71 = arith.mulf %69, %70 : vector<4x80xf32>
    %72 = tpu.concatenate %53, %54, %57, %60, %61, %64, %67, %68, %71 in 0 : vector<4x80xf32>, vector<4x80xf32>, vector<4x80xf32>, vector<4x80xf32>, vector<4x80xf32>, vector<4x80xf32>, vector<4x80xf32>, vector<4x80xf32>, vector<4x80xf32> -> vector<36x80xf32>
    %c0_23 = arith.constant 0 : index
    %c0_24 = arith.constant 0 : index
    %73 = vector.load %arg5[%c0_23, %c0_24] : memref<8x36xf32, #tpu.memory_space<vmem>>, vector<8x36xf32>
    %cst_25 = arith.constant dense<0.000000e+00> : vector<8x80xf32>
    %74 = tpu.matmul %73, %72, %cst_25 {dimension_numbers = #tpu.dot_dimension_numbers<[1], [0], [0], [1], [0, 0, 1, 1], [], []>} : vector<8x36xf32>, vector<36x80xf32>, vector<8x80xf32> -> vector<8x80xf32>
    %c0_26 = arith.constant 0 : index
    %c0_27 = arith.constant 0 : index
    %75 = vector.load %arg6[%c0_26, %c0_27] : memref<8x1xf32, #tpu.memory_space<vmem>>, vector<8x1xf32>
    %76 = vector.broadcast %75 : vector<8x1xf32> to vector<8x80xf32>
    %77 = arith.addf %74, %76 : vector<8x80xf32>
    %cst_28 = arith.constant 5.000000e-01 : f32
    %78 = vector.broadcast %cst_28 : f32 to vector<8x80xf32>
    %79 = arith.mulf %78, %77 : vector<8x80xf32>
    %cst_29 = arith.constant 0.707106769 : f32
    %80 = vector.broadcast %cst_29 : f32 to vector<8x80xf32>
    %81 = arith.mulf %77, %80 : vector<8x80xf32>
    %cst_30 = arith.constant 0.000000e+00 : f32
    %82 = vector.broadcast %cst_30 : f32 to vector<8x80xf32>
    %83 = arith.cmpf oge, %81, %82 : vector<8x80xf32>
    %cst_31 = arith.constant 1.000000e+00 : f32
    %cst_32 = arith.constant -1.000000e+00 : f32
    %84 = vector.broadcast %cst_31 : f32 to vector<8x80xf32>
    %85 = vector.broadcast %cst_32 : f32 to vector<8x80xf32>
    %86 = arith.select %83, %84, %85 : vector<8x80xi1>, vector<8x80xf32>
    %87 = math.absf %81 : vector<8x80xf32>
    %cst_33 = arith.constant 0.327591091 : f32
    %88 = vector.broadcast %cst_33 : f32 to vector<8x80xf32>
    %89 = arith.mulf %88, %87 : vector<8x80xf32>
    %cst_34 = arith.constant 1.000000e+00 : f32
    %90 = vector.broadcast %cst_34 : f32 to vector<8x80xf32>
    %91 = arith.addf %90, %89 : vector<8x80xf32>
    %92 = tpu.reciprocal %91 {approx = true} : vector<8x80xf32> -> vector<8x80xf32>
    %cst_35 = arith.constant 1.06140542 : f32
    %93 = vector.broadcast %cst_35 : f32 to vector<8x80xf32>
    %94 = arith.mulf %93, %92 : vector<8x80xf32>
    %cst_36 = arith.constant -1.45315206 : f32
    %95 = vector.broadcast %cst_36 : f32 to vector<8x80xf32>
    %96 = arith.addf %94, %95 : vector<8x80xf32>
    %97 = arith.mulf %96, %92 : vector<8x80xf32>
    %cst_37 = arith.constant 1.42141378 : f32
    %98 = vector.broadcast %cst_37 : f32 to vector<8x80xf32>
    %99 = arith.addf %97, %98 : vector<8x80xf32>
    %100 = arith.mulf %99, %92 : vector<8x80xf32>
    %cst_38 = arith.constant -0.284496725 : f32
    %101 = vector.broadcast %cst_38 : f32 to vector<8x80xf32>
    %102 = arith.addf %100, %101 : vector<8x80xf32>
    %103 = arith.mulf %102, %92 : vector<8x80xf32>
    %cst_39 = arith.constant 0.254829586 : f32
    %104 = vector.broadcast %cst_39 : f32 to vector<8x80xf32>
    %105 = arith.addf %103, %104 : vector<8x80xf32>
    %106 = arith.mulf %105, %92 : vector<8x80xf32>
    %cst_40 = arith.constant 0.000000e+00 : f32
    %107 = vector.broadcast %cst_40 : f32 to vector<8x80xf32>
    %108 = arith.subf %107, %87 : vector<8x80xf32>
    %109 = arith.mulf %108, %87 : vector<8x80xf32>
    %110 = math.exp %109 : vector<8x80xf32>
    %111 = arith.mulf %106, %110 : vector<8x80xf32>
    %cst_41 = arith.constant 1.000000e+00 : f32
    %112 = vector.broadcast %cst_41 : f32 to vector<8x80xf32>
    %113 = arith.subf %112, %111 : vector<8x80xf32>
    %114 = arith.mulf %86, %113 : vector<8x80xf32>
    %cst_42 = arith.constant 1.000000e+00 : f32
    %115 = vector.broadcast %cst_42 : f32 to vector<8x80xf32>
    %116 = arith.addf %115, %114 : vector<8x80xf32>
    %117 = arith.mulf %79, %116 : vector<8x80xf32>
    %cst_43 = arith.constant 0.000000e+00 : f32
    %118 = vector.broadcast %cst_43 : f32 to vector<8x8xf32>
    %c0_44 = arith.constant 0 : index
    %c0_45 = arith.constant 0 : index
    %119 = vector.load %arg11[%c0_44, %c0_45] : memref<8x96xf32, #tpu.memory_space<vmem>>, vector<8x8xf32>
    tpu.vector_store %arg11[%c0_44, %c0_45], %118 {strides = array<i32>} : memref<8x96xf32, #tpu.memory_space<vmem>>, vector<8x8xf32>,
    %120 = vector.extract_strided_slice %117 {offsets = [0, 0], sizes = [8, 8], strides = [1, 1]} : vector<8x80xf32> to vector<8x8xf32>
    %121 = vector.broadcast %2 : f32 to vector<8x8xf32>
    %122 = arith.mulf %120, %121 : vector<8x8xf32>
    %c0_46 = arith.constant 0 : index
    %c8_47 = arith.constant 8 : index
    %123 = vector.load %arg11[%c0_46, %c8_47] : memref<8x96xf32, #tpu.memory_space<vmem>>, vector<8x8xf32>
    tpu.vector_store %arg11[%c0_46, %c8_47], %122 {strides = array<i32>} : memref<8x96xf32, #tpu.memory_space<vmem>>, vector<8x8xf32>,
    %124 = vector.extract_strided_slice %117 {offsets = [0, 8], sizes = [8, 64], strides = [1, 1]} : vector<8x80xf32> to vector<8x64xf32>
    %c0_48 = arith.constant 0 : index
    %c16 = arith.constant 16 : index
    %125 = vector.load %arg11[%c0_48, %c16] : memref<8x96xf32, #tpu.memory_space<vmem>>, vector<8x64xf32>
    tpu.vector_store %arg11[%c0_48, %c16], %124 {strides = array<i32>} : memref<8x96xf32, #tpu.memory_space<vmem>>, vector<8x64xf32>,
    %126 = vector.extract_strided_slice %117 {offsets = [0, 72], sizes = [8, 8], strides = [1, 1]} : vector<8x80xf32> to vector<8x8xf32>
    %127 = vector.broadcast %5 : f32 to vector<8x8xf32>
    %128 = arith.mulf %126, %127 : vector<8x8xf32>
    %c0_49 = arith.constant 0 : index
    %c80 = arith.constant 80 : index
    %129 = vector.load %arg11[%c0_49, %c80] : memref<8x96xf32, #tpu.memory_space<vmem>>, vector<8x8xf32>
    tpu.vector_store %arg11[%c0_49, %c80], %128 {strides = array<i32>} : memref<8x96xf32, #tpu.memory_space<vmem>>, vector<8x8xf32>,
    %cst_50 = arith.constant 0.000000e+00 : f32
    %130 = vector.broadcast %cst_50 : f32 to vector<8x8xf32>
    %c0_51 = arith.constant 0 : index
    %c88_52 = arith.constant 88 : index
    %131 = vector.load %arg11[%c0_51, %c88_52] : memref<8x96xf32, #tpu.memory_space<vmem>>, vector<8x8xf32>
    tpu.vector_store %arg11[%c0_51, %c88_52], %130 {strides = array<i32>} : memref<8x96xf32, #tpu.memory_space<vmem>>, vector<8x8xf32>,
    %c0_53 = arith.constant 0 : index
    %c0_54 = arith.constant 0 : index
    %132 = vector.load %arg11[%c0_53, %c0_54] : memref<8x96xf32, #tpu.memory_space<vmem>>, vector<8x96xf32>
    %133 = vector.extract_strided_slice %132 {offsets = [0, 7], sizes = [8, 64], strides = [1, 1]} : vector<8x96xf32> to vector<8x64xf32>
    %134 = vector.extract_strided_slice %45 {offsets = [0, 0], sizes = [1, 64], strides = [1, 1]} : vector<1x80xf32> to vector<1x64xf32>
    %135 = vector.broadcast %134 : vector<1x64xf32> to vector<8x64xf32>
    %136 = arith.mulf %133, %135 : vector<8x64xf32>
    %137 = vector.extract_strided_slice %132 {offsets = [0, 8], sizes = [8, 64], strides = [1, 1]} : vector<8x96xf32> to vector<8x64xf32>
    %138 = vector.extract_strided_slice %132 {offsets = [0, 9], sizes = [8, 64], strides = [1, 1]} : vector<8x96xf32> to vector<8x64xf32>
    %139 = vector.extract_strided_slice %49 {offsets = [0, 0], sizes = [1, 64], strides = [1, 1]} : vector<1x80xf32> to vector<1x64xf32>
    %140 = vector.broadcast %139 : vector<1x64xf32> to vector<8x64xf32>
    %141 = arith.mulf %138, %140 : vector<8x64xf32>
    %142 = vector.extract_strided_slice %132 {offsets = [0, 15], sizes = [8, 64], strides = [1, 1]} : vector<8x96xf32> to vector<8x64xf32>
    %143 = vector.extract_strided_slice %45 {offsets = [0, 0], sizes = [1, 64], strides = [1, 1]} : vector<1x80xf32> to vector<1x64xf32>
    %144 = vector.broadcast %143 : vector<1x64xf32> to vector<8x64xf32>
    %145 = arith.mulf %142, %144 : vector<8x64xf32>
    %146 = vector.extract_strided_slice %132 {offsets = [0, 16], sizes = [8, 64], strides = [1, 1]} : vector<8x96xf32> to vector<8x64xf32>
    %147 = vector.extract_strided_slice %132 {offsets = [0, 17], sizes = [8, 64], strides = [1, 1]} : vector<8x96xf32> to vector<8x64xf32>
    %148 = vector.extract_strided_slice %49 {offsets = [0, 0], sizes = [1, 64], strides = [1, 1]} : vector<1x80xf32> to vector<1x64xf32>
    %149 = vector.broadcast %148 : vector<1x64xf32> to vector<8x64xf32>
    %150 = arith.mulf %147, %149 : vector<8x64xf32>
    %151 = vector.extract_strided_slice %132 {offsets = [0, 23], sizes = [8, 64], strides = [1, 1]} : vector<8x96xf32> to vector<8x64xf32>
    %152 = vector.extract_strided_slice %45 {offsets = [0, 0], sizes = [1, 64], strides = [1, 1]} : vector<1x80xf32> to vector<1x64xf32>
    %153 = vector.broadcast %152 : vector<1x64xf32> to vector<8x64xf32>
    %154 = arith.mulf %151, %153 : vector<8x64xf32>
    %155 = vector.extract_strided_slice %132 {offsets = [0, 24], sizes = [8, 64], strides = [1, 1]} : vector<8x96xf32> to vector<8x64xf32>
    %156 = vector.extract_strided_slice %132 {offsets = [0, 25], sizes = [8, 64], strides = [1, 1]} : vector<8x96xf32> to vector<8x64xf32>
    %157 = vector.extract_strided_slice %49 {offsets = [0, 0], sizes = [1, 64], strides = [1, 1]} : vector<1x80xf32> to vector<1x64xf32>
    %158 = vector.broadcast %157 : vector<1x64xf32> to vector<8x64xf32>
    %159 = arith.mulf %156, %158 : vector<8x64xf32>
    %160 = tpu.concatenate %136, %137, %141, %145, %146, %150, %154, %155, %159 in 0 : vector<8x64xf32>, vector<8x64xf32>, vector<8x64xf32>, vector<8x64xf32>, vector<8x64xf32>, vector<8x64xf32>, vector<8x64xf32>, vector<8x64xf32>, vector<8x64xf32> -> vector<72x64xf32>
    %c0_55 = arith.constant 0 : index
    %c0_56 = arith.constant 0 : index
    %161 = vector.load %arg7[%c0_55, %c0_56] : memref<8x72xf32, #tpu.memory_space<vmem>>, vector<8x72xf32>
    %cst_57 = arith.constant dense<0.000000e+00> : vector<8x64xf32>
    %162 = tpu.matmul %161, %160, %cst_57 {dimension_numbers = #tpu.dot_dimension_numbers<[1], [0], [0], [1], [0, 0, 1, 1], [], []>} : vector<8x72xf32>, vector<72x64xf32>, vector<8x64xf32> -> vector<8x64xf32>
    %c0_58 = arith.constant 0 : index
    %c0_59 = arith.constant 0 : index
    %163 = vector.load %arg8[%c0_58, %c0_59] : memref<8x1xf32, #tpu.memory_space<vmem>>, vector<8x1xf32>
    %164 = vector.broadcast %163 : vector<8x1xf32> to vector<8x64xf32>
    %165 = arith.addf %162, %164 : vector<8x64xf32>
    %cst_60 = arith.constant 5.000000e-01 : f32
    %166 = vector.broadcast %cst_60 : f32 to vector<8x64xf32>
    %167 = arith.mulf %166, %165 : vector<8x64xf32>
    %cst_61 = arith.constant 0.707106769 : f32
    %168 = vector.broadcast %cst_61 : f32 to vector<8x64xf32>
    %169 = arith.mulf %165, %168 : vector<8x64xf32>
    %cst_62 = arith.constant 0.000000e+00 : f32
    %170 = vector.broadcast %cst_62 : f32 to vector<8x64xf32>
    %171 = arith.cmpf oge, %169, %170 : vector<8x64xf32>
    %cst_63 = arith.constant 1.000000e+00 : f32
    %cst_64 = arith.constant -1.000000e+00 : f32
    %172 = vector.broadcast %cst_63 : f32 to vector<8x64xf32>
    %173 = vector.broadcast %cst_64 : f32 to vector<8x64xf32>
    %174 = arith.select %171, %172, %173 : vector<8x64xi1>, vector<8x64xf32>
    %175 = math.absf %169 : vector<8x64xf32>
    %cst_65 = arith.constant 0.327591091 : f32
    %176 = vector.broadcast %cst_65 : f32 to vector<8x64xf32>
    %177 = arith.mulf %176, %175 : vector<8x64xf32>
    %cst_66 = arith.constant 1.000000e+00 : f32
    %178 = vector.broadcast %cst_66 : f32 to vector<8x64xf32>
    %179 = arith.addf %178, %177 : vector<8x64xf32>
    %180 = tpu.reciprocal %179 {approx = true} : vector<8x64xf32> -> vector<8x64xf32>
    %cst_67 = arith.constant 1.06140542 : f32
    %181 = vector.broadcast %cst_67 : f32 to vector<8x64xf32>
    %182 = arith.mulf %181, %180 : vector<8x64xf32>
    %cst_68 = arith.constant -1.45315206 : f32
    %183 = vector.broadcast %cst_68 : f32 to vector<8x64xf32>
    %184 = arith.addf %182, %183 : vector<8x64xf32>
    %185 = arith.mulf %184, %180 : vector<8x64xf32>
    %cst_69 = arith.constant 1.42141378 : f32
    %186 = vector.broadcast %cst_69 : f32 to vector<8x64xf32>
    %187 = arith.addf %185, %186 : vector<8x64xf32>
    %188 = arith.mulf %187, %180 : vector<8x64xf32>
    %cst_70 = arith.constant -0.284496725 : f32
    %189 = vector.broadcast %cst_70 : f32 to vector<8x64xf32>
    %190 = arith.addf %188, %189 : vector<8x64xf32>
    %191 = arith.mulf %190, %180 : vector<8x64xf32>
    %cst_71 = arith.constant 0.254829586 : f32
    %192 = vector.broadcast %cst_71 : f32 to vector<8x64xf32>
    %193 = arith.addf %191, %192 : vector<8x64xf32>
    %194 = arith.mulf %193, %180 : vector<8x64xf32>
    %cst_72 = arith.constant 0.000000e+00 : f32
    %195 = vector.broadcast %cst_72 : f32 to vector<8x64xf32>
    %196 = arith.subf %195, %175 : vector<8x64xf32>
    %197 = arith.mulf %196, %175 : vector<8x64xf32>
    %198 = math.exp %197 : vector<8x64xf32>
    %199 = arith.mulf %194, %198 : vector<8x64xf32>
    %cst_73 = arith.constant 1.000000e+00 : f32
    %200 = vector.broadcast %cst_73 : f32 to vector<8x64xf32>
    %201 = arith.subf %200, %199 : vector<8x64xf32>
    %202 = arith.mulf %174, %201 : vector<8x64xf32>
    %cst_74 = arith.constant 1.000000e+00 : f32
    %203 = vector.broadcast %cst_74 : f32 to vector<8x64xf32>
    %204 = arith.addf %203, %202 : vector<8x64xf32>
    %205 = arith.mulf %167, %204 : vector<8x64xf32>
    %c0_75 = arith.constant 0 : index
    %c0_76 = arith.constant 0 : index
    %c0_77 = arith.constant 0 : index
    %206 = vector.load %arg9[%c0_75, %c0_76, %c0_77] : memref<1x8x64xf32, #tpu.memory_space<vmem>>, vector<1x8x64xf32>
    %207 = vector.shape_cast %206 : vector<1x8x64xf32> to vector<8x64xf32>
    %208 = vector.shape_cast %205 : vector<8x64xf32> to vector<1x8x64xf32>
    tpu.vector_store %arg9[%c0_75, %c0_76, %c0_77], %208 {strides = array<i32>} : memref<1x8x64xf32, #tpu.memory_space<vmem>>, vector<1x8x64xf32>,
    return
  }
  func.func @transform_0(%arg0: i32, %arg1: i32) -> (i32, i32, i32) {
    %c1_i32 = arith.constant 1 : i32
    %0 = arith.subi %arg1, %c1_i32 : i32
    %c0_i32 = arith.constant 0 : i32
    %1 = arith.maxsi %0, %c0_i32 : i32
    %c0_i32_0 = arith.constant 0 : i32
    %c0_i32_1 = arith.constant 0 : i32
    return %arg0, %c0_i32_0, %1 : i32, i32, i32
  }
  func.func @transform_1(%arg0: i32, %arg1: i32) -> (i32, i32, i32) {
    %c0_i32 = arith.constant 0 : i32
    %c0_i32_0 = arith.constant 0 : i32
    return %arg0, %c0_i32, %arg1 : i32, i32, i32
  }
  func.func @transform_2(%arg0: i32, %arg1: i32) -> (i32, i32, i32) {
    %c1_i32 = arith.constant 1 : i32
    %0 = arith.addi %arg1, %c1_i32 : i32
    %c0_i32 = arith.constant 0 : i32
    %1 = arith.minsi %0, %c0_i32 : i32
    %c0_i32_0 = arith.constant 0 : i32
    %c0_i32_1 = arith.constant 0 : i32
    return %arg0, %c0_i32_0, %1 : i32, i32, i32
  }
  func.func @transform_3(%arg0: i32, %arg1: i32) -> (i32, i32) {
    %c0_i32 = arith.constant 0 : i32
    %c0_i32_0 = arith.constant 0 : i32
    %c0_i32_1 = arith.constant 0 : i32
    return %c0_i32, %c0_i32_0 : i32, i32
  }
  func.func @transform_4(%arg0: i32, %arg1: i32) -> (i32, i32) {
    %c0_i32 = arith.constant 0 : i32
    %c0_i32_0 = arith.constant 0 : i32
    %c0_i32_1 = arith.constant 0 : i32
    return %c0_i32, %c0_i32_0 : i32, i32
  }
  func.func @transform_5(%arg0: i32, %arg1: i32) -> (i32, i32) {
    %c0_i32 = arith.constant 0 : i32
    %c0_i32_0 = arith.constant 0 : i32
    %c0_i32_1 = arith.constant 0 : i32
    return %c0_i32, %c0_i32_0 : i32, i32
  }
  func.func @transform_6(%arg0: i32, %arg1: i32) -> (i32, i32) {
    %c0_i32 = arith.constant 0 : i32
    %c0_i32_0 = arith.constant 0 : i32
    %c0_i32_1 = arith.constant 0 : i32
    return %c0_i32, %c0_i32_0 : i32, i32
  }
  func.func @transform_7(%arg0: i32, %arg1: i32) -> (i32, i32, i32) {
    %c0_i32 = arith.constant 0 : i32
    %c0_i32_0 = arith.constant 0 : i32
    return %arg0, %c0_i32, %arg1 : i32, i32, i32
  }
}

</mosaic_0001>

<llo_original>
// kernel: down2_forward.2
$region0: #{down2_forward.2}
  #allocation0 [shape = 'u32[]', space=smem, size = 0x4, offset = 0x4, fixed_abs, tag = 'smem constant byte address 0x4 - core index']
  #allocation1 [shape = 'u32[72,128]{1,0:T(1,128)}', space=vmem, size = 0x9000, scoped, tag = 'internal scratch']
  %s0 = inlined_call_operand.vmem [shape: f32[2,16,64], index: 0, kind: input, shape index: {}]
  %s1 = inlined_call_operand.vmem [shape: f32[2,16,64], index: 1, kind: input, shape index: {}]
  %s2 = inlined_call_operand.vmem [shape: f32[2,4,64], index: 2, kind: input, shape index: {}]
  %s3 = inlined_call_operand.vmem [shape: f32[2,4,64], index: 3, kind: input, shape index: {}]
  %s4 = inlined_call_operand.vmem [shape: f32[4,16], index: 4, kind: input, shape index: {}]
  %s5 = inlined_call_operand.vmem [shape: f32[4,1], index: 5, kind: input, shape index: {}]
  %s6 = inlined_call_operand.vmem [shape: f32[4,16], index: 6, kind: input, shape index: {}]
  %s7 = inlined_call_operand.vmem [shape: f32[4,1], index: 7, kind: input, shape index: {}]
  %s8 = inlined_call_operand.vmem [shape: f32[4,4], index: 8, kind: input, shape index: {}]
  %s9 = inlined_call_operand.vmem [shape: f32[4,4], index: 9, kind: input, shape index: {}]
  %s10 = inlined_call_operand.vmem [shape: f32[4,4], index: 10, kind: input, shape index: {}]
  %s11 = inlined_call_operand.vmem [shape: f32[4,1], index: 11, kind: input, shape index: {}]
  %s12 = inlined_call_operand.vmem [shape: f32[2,4,64], index: 12, kind: output, shape index: {}]
  %s13 = sld [smem:[#allocation0]]
  $region81: #{down2_forward.2} parent=0
    _
  %s15 = ssub.s32 1, %s13
  %s16 = scalar_select 0, %s15, %s13
  loop: start=0, step=1, limit=4
  $region2: #{down2_forward.2} parent=0 // loop_pre_header
    _
  $region3: #{down2_forward.2} parent=0 // loop_header
    %s18 = sphi 0, %s22
    %p19 = scmp.ge.s32.totalorder %s18, 4
    %s25 = sphi 0, %s37
    %s26 = sphi 0, %s33
    %s27 = sphi 0, %s25
    %s28 = sphi 0, %s26
    %s29 = sphi 0, %s27
    %s30 = sphi 0, %s28
    %s42 = sphi 0, %s44
    %s45 = sphi 0, %s42
    %s46 = sphi 0, %s45
    %s62 = sphi 0, %s46
    %s70 = sphi 0, %s72
    %s73 = sphi 0, %s70
    %s74 = sphi 0, %s73
    %s90 = sphi 0, %s74
    %s98 = sphi 0, %s100
    %s101 = sphi 0, %s98
    %s102 = sphi 0, %s101
    %s118 = sphi 0, %s102
    %s126 = sphi 0, %s128
    %s129 = sphi 0, %s126
    %s130 = sphi 0, %s129
    %s146 = sphi 0, %s130
    %s150 = sphi 0, %s150
    %s152 = sphi 0, %s150
    %s153 = sphi 0, %s152
    %s167 = sphi 0, %s153
    %s171 = sphi 0, %s171
    %s173 = sphi 0, %s171
    %s174 = sphi 0, %s173
    %s188 = sphi 0, %s174
    %s192 = sphi 0, %s192
    %s194 = sphi 0, %s192
    %s195 = sphi 0, %s194
    %s209 = sphi 0, %s195
    %s213 = sphi 0, %s213
    %s215 = sphi 0, %s213
    %s216 = sphi 0, %s215
    %s230 = sphi 0, %s216
    %s234 = sphi 0, %s234
    %s236 = sphi 0, %s234
    %s237 = sphi 0, %s236
    %s251 = sphi 0, %s237
    %s255 = sphi 0, %s255
    %s257 = sphi 0, %s255
    %s258 = sphi 0, %s257
    %s272 = sphi 0, %s258
    %s276 = sphi 0, %s276
    %s278 = sphi 0, %s276
    %s279 = sphi 0, %s278
    %s293 = sphi 0, %s279
    %s297 = sphi 0, %s297
    %s299 = sphi 0, %s297
    %s300 = sphi 0, %s299
    %s314 = sphi 0, %s300
    %s322 = sphi 0, %s324
    %s325 = sphi 0, %s322
    %s326 = sphi 0, %s325
    %s342 = sphi 0, %s326
  $region4: #{down2_forward.2} parent=0 // loop_header_branch
    %21 = sbr.rel (%p19) target = $region8
  $region5: #{down2_forward.2} parent=0 // loop_body
    %s23 = ssub.s32 %s18, 1
    %s24 = ssub.s32 %s18, 2
    %s31 = sadd.s32 1, %s26
    %p32 = scmp.ge.s32.totalorder %s31, 1
    %s33 = scalar_select %p32, 0, %s31
    %s34 = sadd.s32 1, %s25
    %s35 = scalar_select %p32, %s34, %s25
    %p36 = scmp.ge.s32.totalorder %s35, 2
    %s37 = scalar_select %p36, 0, %s35
    %s38 = ssub.s32 %s25, %s37
    %s39 = ssub.s32 %s26, %s33
    %s40 = sor.u32 %s38, %s39
    %p41 = scmp.eq.s32.totalorder %s40, 0
    %s43 = sadd.s32 %s42, 1
    %s44 = scalar_select %p41, %s42, %s43
    %p47 = pneg %p41
    %p48 = scmp.eq.s32.totalorder %s18, 1
    %p49 = por %p47, %p48
    %p50 = scmp.ne.s32.totalorder %s42, %s45
    %p51 = scmp.eq.s32.totalorder %s18, 0
    %p52 = por %p50, %p51
    %p53 = scmp.ne.s32.totalorder %s42, %s45
    %p54 = scmp.eq.s32.totalorder %s23, 1
    %p55 = por %p53, %p54
    %p56 = scmp.ne.s32.totalorder %s45, %s46
    %p57 = scmp.eq.s32.totalorder %s23, 0
    %p58 = por %p56, %p57
    %p59 = scmp.ne.s32.totalorder %s45, %s46
    %p60 = scmp.eq.s32.totalorder %s24, 1
    %p61 = por %p59, %p60
    %p63 = scmp.ne.s32.totalorder %s46, %s62
    %p64 = scmp.eq.s32.totalorder %s24, 0
    %p65 = por %p63, %p64
    %s66 = ssub.s32 %s25, %s37
    %s67 = ssub.s32 %s26, %s33
    %s68 = sor.u32 %s66, %s67
    %p69 = scmp.eq.s32.totalorder %s68, 0
    %s71 = sadd.s32 %s70, 1
    %s72 = scalar_select %p69, %s70, %s71
    %p75 = pneg %p69
    %p76 = scmp.eq.s32.totalorder %s18, 1
    %p77 = por %p75, %p76
    %p78 = scmp.ne.s32.totalorder %s70, %s73
    %p79 = scmp.eq.s32.totalorder %s18, 0
    %p80 = por %p78, %p79
    %p81 = scmp.ne.s32.totalorder %s70, %s73
    %p82 = scmp.eq.s32.totalorder %s23, 1
    %p83 = por %p81, %p82
    %p84 = scmp.ne.s32.totalorder %s73, %s74
    %p85 = scmp.eq.s32.totalorder %s23, 0
    %p86 = por %p84, %p85
    %p87 = scmp.ne.s32.totalorder %s73, %s74
    %p88 = scmp.eq.s32.totalorder %s24, 1
    %p89 = por %p87, %p88
    %p91 = scmp.ne.s32.totalorder %s74, %s90
    %p92 = scmp.eq.s32.totalorder %s24, 0
    %p93 = por %p91, %p92
    %s94 = ssub.s32 %s25, %s37
    %s95 = ssub.s32 %s26, %s33
    %s96 = sor.u32 %s94, %s95
    %p97 = scmp.eq.s32.totalorder %s96, 0
    %s99 = sadd.s32 %s98, 1
    %s100 = scalar_select %p97, %s98, %s99
    %p103 = pneg %p97
    %p104 = scmp.eq.s32.totalorder %s18, 1
    %p105 = por %p103, %p104
    %p106 = scmp.ne.s32.totalorder %s98, %s101
    %p107 = scmp.eq.s32.totalorder %s18, 0
    %p108 = por %p106, %p107
    %p109 = scmp.ne.s32.totalorder %s98, %s101
    %p110 = scmp.eq.s32.totalorder %s23, 1
    %p111 = por %p109, %p110
    %p112 = scmp.ne.s32.totalorder %s101, %s102
    %p113 = scmp.eq.s32.totalorder %s23, 0
    %p114 = por %p112, %p113
    %p115 = scmp.ne.s32.totalorder %s101, %s102
    %p116 = scmp.eq.s32.totalorder %s24, 1
    %p117 = por %p115, %p116
    %p119 = scmp.ne.s32.totalorder %s102, %s118
    %p120 = scmp.eq.s32.totalorder %s24, 0
    %p121 = por %p119, %p120
    %s122 = ssub.s32 %s25, %s37
    %s123 = ssub.s32 %s26, %s33
    %s124 = sor.u32 %s122, %s123
    %p125 = scmp.eq.s32.totalorder %s124, 0
    %s127 = sadd.s32 %s126, 1
    %s128 = scalar_select %p125, %s126, %s127
    %p131 = pneg %p125
    %p132 = scmp.eq.s32.totalorder %s18, 1
    %p133 = por %p131, %p132
    %p134 = scmp.ne.s32.totalorder %s126, %s129
    %p135 = scmp.eq.s32.totalorder %s18, 0
    %p136 = por %p134, %p135
    %p137 = scmp.ne.s32.totalorder %s126, %s129
    %p138 = scmp.eq.s32.totalorder %s23, 1
    %p139 = por %p137, %p138
    %p140 = scmp.ne.s32.totalorder %s129, %s130
    %p141 = scmp.eq.s32.totalorder %s23, 0
    %p142 = por %p140, %p141
    %p143 = scmp.ne.s32.totalorder %s129, %s130
    %p144 = scmp.eq.s32.totalorder %s24, 1
    %p145 = por %p143, %p144
    %p147 = scmp.ne.s32.totalorder %s130, %s146
    %p148 = scmp.eq.s32.totalorder %s24, 0
    %p149 = por %p147, %p148
    %s151 = sadd.s32 %s150, 1
    %p154 = scmp.eq.s32.totalorder %s18, 1
    %p155 = scmp.ne.s32.totalorder %s150, %s152
    %p156 = scmp.eq.s32.totalorder %s18, 0
    %p157 = por %p155, %p156
    %p158 = scmp.ne.s32.totalorder %s150, %s152
    %p159 = scmp.eq.s32.totalorder %s23, 1
    %p160 = por %p158, %p159
    %p161 = scmp.ne.s32.totalorder %s152, %s153
    %p162 = scmp.eq.s32.totalorder %s23, 0
    %p163 = por %p161, %p162
    %p164 = scmp.ne.s32.totalorder %s152, %s153
    %p165 = scmp.eq.s32.totalorder %s24, 1
    %p166 = por %p164, %p165
    %p168 = scmp.ne.s32.totalorder %s153, %s167
    %p169 = scmp.eq.s32.totalorder %s24, 0
    %p170 = por %p168, %p169
    %s172 = sadd.s32 %s171, 1
    %p175 = scmp.eq.s32.totalorder %s18, 1
    %p176 = scmp.ne.s32.totalorder %s171, %s173
    %p177 = scmp.eq.s32.totalorder %s18, 0
    %p178 = por %p176, %p177
    %p179 = scmp.ne.s32.totalorder %s171, %s173
    %p180 = scmp.eq.s32.totalorder %s23, 1
    %p181 = por %p179, %p180
    %p182 = scmp.ne.s32.totalorder %s173, %s174
    %p183 = scmp.eq.s32.totalorder %s23, 0
    %p184 = por %p182, %p183
    %p185 = scmp.ne.s32.totalorder %s173, %s174
    %p186 = scmp.eq.s32.totalorder %s24, 1
    %p187 = por %p185, %p186
    %p189 = scmp.ne.s32.totalorder %s174, %s188
    %p190 = scmp.eq.s32.totalorder %s24, 0
    %p191 = por %p189, %p190
    %s193 = sadd.s32 %s192, 1
    %p196 = scmp.eq.s32.totalorder %s18, 1
    %p197 = scmp.ne.s32.totalorder %s192, %s194
    %p198 = scmp.eq.s32.totalorder %s18, 0
    %p199 = por %p197, %p198
    %p200 = scmp.ne.s32.totalorder %s192, %s194
    %p201 = scmp.eq.s32.totalorder %s23, 1
    %p202 = por %p200, %p201
    %p203 = scmp.ne.s32.totalorder %s194, %s195
    %p204 = scmp.eq.s32.totalorder %s23, 0
    %p205 = por %p203, %p204
    %p206 = scmp.ne.s32.totalorder %s194, %s195
    %p207 = scmp.eq.s32.totalorder %s24, 1
    %p208 = por %p206, %p207
    %p210 = scmp.ne.s32.totalorder %s195, %s209
    %p211 = scmp.eq.s32.totalorder %s24, 0
    %p212 = por %p210, %p211
    %s214 = sadd.s32 %s213, 1
    %p217 = scmp.eq.s32.totalorder %s18, 1
    %p218 = scmp.ne.s32.totalorder %s213, %s215
    %p219 = scmp.eq.s32.totalorder %s18, 0
    %p220 = por %p218, %p219
    %p221 = scmp.ne.s32.totalorder %s213, %s215
    %p222 = scmp.eq.s32.totalorder %s23, 1
    %p223 = por %p221, %p222
    %p224 = scmp.ne.s32.totalorder %s215, %s216
    %p225 = scmp.eq.s32.totalorder %s23, 0
    %p226 = por %p224, %p225
    %p227 = scmp.ne.s32.totalorder %s215, %s216
    %p228 = scmp.eq.s32.totalorder %s24, 1
    %p229 = por %p227, %p228
    %p231 = scmp.ne.s32.totalorder %s216, %s230
    %p232 = scmp.eq.s32.totalorder %s24, 0
    %p233 = por %p231, %p232
    %s235 = sadd.s32 %s234, 1
    %p238 = scmp.eq.s32.totalorder %s18, 1
    %p239 = scmp.ne.s32.totalorder %s234, %s236
    %p240 = scmp.eq.s32.totalorder %s18, 0
    %p241 = por %p239, %p240
    %p242 = scmp.ne.s32.totalorder %s234, %s236
    %p243 = scmp.eq.s32.totalorder %s23, 1
    %p244 = por %p242, %p243
    %p245 = scmp.ne.s32.totalorder %s236, %s237
    %p246 = scmp.eq.s32.totalorder %s23, 0
    %p247 = por %p245, %p246
    %p248 = scmp.ne.s32.totalorder %s236, %s237
    %p249 = scmp.eq.s32.totalorder %s24, 1
    %p250 = por %p248, %p249
    %p252 = scmp.ne.s32.totalorder %s237, %s251
    %p253 = scmp.eq.s32.totalorder %s24, 0
    %p254 = por %p252, %p253
    %s256 = sadd.s32 %s255, 1
    %p259 = scmp.eq.s32.totalorder %s18, 1
    %p260 = scmp.ne.s32.totalorder %s255, %s257
    %p261 = scmp.eq.s32.totalorder %s18, 0
    %p262 = por %p260, %p261
    %p263 = scmp.ne.s32.totalorder %s255, %s257
    %p264 = scmp.eq.s32.totalorder %s23, 1
    %p265 = por %p263, %p264
    %p266 = scmp.ne.s32.totalorder %s257, %s258
    %p267 = scmp.eq.s32.totalorder %s23, 0
    %p268 = por %p266, %p267
    %p269 = scmp.ne.s32.totalorder %s257, %s258
    %p270 = scmp.eq.s32.totalorder %s24, 1
    %p271 = por %p269, %p270
    %p273 = scmp.ne.s32.totalorder %s258, %s272
    %p274 = scmp.eq.s32.totalorder %s24, 0
    %p275 = por %p273, %p274
    %s277 = sadd.s32 %s276, 1
    %p280 = scmp.eq.s32.totalorder %s18, 1
    %p281 = scmp.ne.s32.totalorder %s276, %s278
    %p282 = scmp.eq.s32.totalorder %s18, 0
    %p283 = por %p281, %p282
    %p284 = scmp.ne.s32.totalorder %s276, %s278
    %p285 = scmp.eq.s32.totalorder %s23, 1
    %p286 = por %p284, %p285
    %p287 = scmp.ne.s32.totalorder %s278, %s279
    %p288 = scmp.eq.s32.totalorder %s23, 0
    %p289 = por %p287, %p288
    %p290 = scmp.ne.s32.totalorder %s278, %s279
    %p291 = scmp.eq.s32.totalorder %s24, 1
    %p292 = por %p290, %p291
    %p294 = scmp.ne.s32.totalorder %s279, %s293
    %p295 = scmp.eq.s32.totalorder %s24, 0
    %p296 = por %p294, %p295
    %s298 = sadd.s32 %s297, 1
    %p301 = scmp.eq.s32.totalorder %s18, 1
    %p302 = scmp.ne.s32.totalorder %s297, %s299
    %p303 = scmp.eq.s32.totalorder %s18, 0
    %p304 = por %p302, %p303
    %p305 = scmp.ne.s32.totalorder %s297, %s299
    %p306 = scmp.eq.s32.totalorder %s23, 1
    %p307 = por %p305, %p306
    %p308 = scmp.ne.s32.totalorder %s299, %s300
    %p309 = scmp.eq.s32.totalorder %s23, 0
    %p310 = por %p308, %p309
    %p311 = scmp.ne.s32.totalorder %s299, %s300
    %p312 = scmp.eq.s32.totalorder %s24, 1
    %p313 = por %p311, %p312
    %p315 = scmp.ne.s32.totalorder %s300, %s314
    %p316 = scmp.eq.s32.totalorder %s24, 0
    %p317 = por %p315, %p316
    %s318 = ssub.s32 %s25, %s37
    %s319 = ssub.s32 %s26, %s33
    %s320 = sor.u32 %s318, %s319
    %p321 = scmp.eq.s32.totalorder %s320, 0
    %s323 = sadd.s32 %s322, 1
    %s324 = scalar_select %p321, %s322, %s323
    %p327 = pneg %p321
    %p328 = scmp.eq.s32.totalorder %s18, 1
    %p329 = por %p327, %p328
    %p330 = scmp.ne.s32.totalorder %s322, %s325
    %p331 = scmp.eq.s32.totalorder %s18, 0
    %p332 = por %p330, %p331
    %p333 = scmp.ne.s32.totalorder %s322, %s325
    %p334 = scmp.eq.s32.totalorder %s23, 1
    %p335 = por %p333, %p334
    %p336 = scmp.ne.s32.totalorder %s325, %s326
    %p337 = scmp.eq.s32.totalorder %s23, 0
    %p338 = por %p336, %p337
    %p339 = scmp.ne.s32.totalorder %s325, %s326
    %p340 = scmp.eq.s32.totalorder %s24, 1
    %p341 = por %p339, %p340
    %p343 = scmp.ne.s32.totalorder %s326, %s342
    %p344 = scmp.eq.s32.totalorder %s24, 0
    %p345 = por %p343, %p344
    %p346 = scmp.le.s32.totalorder 1, %s18
    %p347 = scmp.lt.s32.totalorder %s18, 3
    %p348 = pnand %p346, %p347
    %p349 = pneg %p348
    // Predicated region
    $region9: #{down2_forward.2} parent=5 // pred_check
      _
    $region10: #{down2_forward.2} parent=5 // pred_check_branch
      %351 = sbr.rel (%p348) target = $region12
    $region11: #{down2_forward.2} parent=5 // pred_region
      %s352 = ssub.s32 %s18, 1
      // Predicated region
      $region13: #{down2_forward.2} parent=11 // pred_check
        %p353 = pneg %p163
      $region14: #{down2_forward.2} parent=11 // pred_check_branch
        %355 = sbr.rel (%p353) target = $region16
      $region15: #{down2_forward.2} parent=11 // pred_region
        _
      $region16: #{down2_forward.2} parent=11 // pred_fallthru
        _
      // Predicated region
      $region17: #{down2_forward.2} parent=11 // pred_check
        %p356 = pneg %p184
      $region18: #{down2_forward.2} parent=11 // pred_check_branch
        %358 = sbr.rel (%p356) target = $region20
      $region19: #{down2_forward.2} parent=11 // pred_region
        _
      $region20: #{down2_forward.2} parent=11 // pred_fallthru
        _
      // Predicated region
      $region21: #{down2_forward.2} parent=11 // pred_check
        %p359 = pneg %p205
      $region22: #{down2_forward.2} parent=11 // pred_check_branch
        %361 = sbr.rel (%p359) target = $region24
      $region23: #{down2_forward.2} parent=11 // pred_region
        _
      $region24: #{down2_forward.2} parent=11 // pred_fallthru
        _
      // Predicated region
      $region25: #{down2_forward.2} parent=11 // pred_check
        %p362 = pneg %p226
      $region26: #{down2_forward.2} parent=11 // pred_check_branch
        %364 = sbr.rel (%p362) target = $region28
      $region27: #{down2_forward.2} parent=11 // pred_region
        _
      $region28: #{down2_forward.2} parent=11 // pred_fallthru
        _
      // Predicated region
      $region29: #{down2_forward.2} parent=11 // pred_check
        %p365 = pneg %p247
      $region30: #{down2_forward.2} parent=11 // pred_check_branch
        %367 = sbr.rel (%p365) target = $region32
      $region31: #{down2_forward.2} parent=11 // pred_region
        _
      $region32: #{down2_forward.2} parent=11 // pred_fallthru
        _
      // Predicated region
      $region33: #{down2_forward.2} parent=11 // pred_check
        %p368 = pneg %p268
      $region34: #{down2_forward.2} parent=11 // pred_check_branch
        %370 = sbr.rel (%p368) target = $region36
      $region35: #{down2_forward.2} parent=11 // pred_region
        _
      $region36: #{down2_forward.2} parent=11 // pred_fallthru
        _
      // Predicated region
      $region37: #{down2_forward.2} parent=11 // pred_check
        %p371 = pneg %p289
      $region38: #{down2_forward.2} parent=11 // pred_check_branch
        %373 = sbr.rel (%p371) target = $region40
      $region39: #{down2_forward.2} parent=11 // pred_region
        _
      $region40: #{down2_forward.2} parent=11 // pred_fallthru
        _
      // Predicated region
      $region41: #{down2_forward.2} parent=11 // pred_check
        %p374 = pneg %p310
      $region42: #{down2_forward.2} parent=11 // pred_check_branch
        %376 = sbr.rel (%p374) target = $region44
      $region43: #{down2_forward.2} parent=11 // pred_region
        _
      $region44: #{down2_forward.2} parent=11 // pred_fallthru
        _
    $region12: #{down2_forward.2} parent=5 // pred_fallthru
      _
    %p377 = scmp.lt.s32.totalorder %s18, 2
    // Predicated region
    $region45: #{down2_forward.2} parent=5 // pred_check
      %p378 = pneg %p377
    $region46: #{down2_forward.2} parent=5 // pred_check_branch
      %380 = sbr.rel (%p378) target = $region48
    $region47: #{down2_forward.2} parent=5 // pred_region
      // Predicated region
      $region49: #{down2_forward.2} parent=47 // pred_check
        %p381 = pneg %p52
      $region50: #{down2_forward.2} parent=47 // pred_check_branch
        %383 = sbr.rel (%p381) target = $region52
      $region51: #{down2_forward.2} parent=47 // pred_region
        %p384 = scmp.lt.s32.totalorder %s25, 1
        %s385 = scalar_select %p384, %s25, 1
        %p386 = scmp.lt.s32.totalorder %s26, 0
        %s387 = scalar_select %p386, %s26, 0
        %s388 = smul.addr %s385, 2
        %s389 = sadd.s32 %s387, %s388
        %s390 = smul.addr %s389, 8
        %s391 = scalar_lea.vmem %s0, %s390
      $region52: #{down2_forward.2} parent=47 // pred_fallthru
        _
      // Predicated region
      $region53: #{down2_forward.2} parent=47 // pred_check
        %p392 = pneg %p80
      $region54: #{down2_forward.2} parent=47 // pred_check_branch
        %394 = sbr.rel (%p392) target = $region56
      $region55: #{down2_forward.2} parent=47 // pred_region
        %p395 = scmp.lt.s32.totalorder %s25, 1
        %s396 = scalar_select %p395, %s25, 1
        %p397 = scmp.lt.s32.totalorder %s26, 0
        %s398 = scalar_select %p397, %s26, 0
        %s399 = smul.addr %s396, 2
        %s400 = sadd.s32 %s398, %s399
        %s401 = smul.addr %s400, 8
        %s402 = scalar_lea.vmem %s1, %s401
      $region56: #{down2_forward.2} parent=47 // pred_fallthru
        _
      // Predicated region
      $region57: #{down2_forward.2} parent=47 // pred_check
        %p403 = pneg %p108
      $region58: #{down2_forward.2} parent=47 // pred_check_branch
        %405 = sbr.rel (%p403) target = $region60
      $region59: #{down2_forward.2} parent=47 // pred_region
        %p406 = scmp.lt.s32.totalorder %s25, 1
        %s407 = scalar_select %p406, %s25, 1
        %p408 = scmp.lt.s32.totalorder %s26, 0
        %s409 = scalar_select %p408, %s26, 0
        %s410 = sadd.s32 %s409, %s407
        %s411 = smul.addr %s410, 4
        %s412 = scalar_lea.vmem %s2, %s411
      $region60: #{down2_forward.2} parent=47 // pred_fallthru
        _
      // Predicated region
      $region61: #{down2_forward.2} parent=47 // pred_check
        %p413 = pneg %p136
      $region62: #{down2_forward.2} parent=47 // pred_check_branch
        %415 = sbr.rel (%p413) target = $region64
      $region63: #{down2_forward.2} parent=47 // pred_region
        %p416 = scmp.lt.s32.totalorder %s25, 1
        %s417 = scalar_select %p416, %s25, 1
        %p418 = scmp.lt.s32.totalorder %s26, 0
        %s419 = scalar_select %p418, %s26, 0
        %s420 = sadd.s32 %s419, %s417
        %s421 = smul.addr %s420, 4
        %s422 = scalar_lea.vmem %s3, %s421
      $region64: #{down2_forward.2} parent=47 // pred_fallthru
        _
    $region48: #{down2_forward.2} parent=5 // pred_fallthru
      _
    %p423 = scmp.le.s32.totalorder 1, %s18
    %p424 = scmp.lt.s32.totalorder %s18, 3
    %p425 = pnand %p423, %p424
    %p426 = pneg %p425
    // Predicated region
    $region65: #{down2_forward.2} parent=5 // pred_check
      _
    $region66: #{down2_forward.2} parent=5 // pred_check_branch
      %428 = sbr.rel (%p425) target = $region68
    $region67: #{down2_forward.2} parent=5 // pred_region
      %s429 = ssub.s32 %s18, 1
      %p430 = scmp.lt.s32.totalorder %s27, 1
      %s431 = scalar_select %p430, %s27, 1
      %p432 = scmp.lt.s32.totalorder %s28, 0
      %s433 = scalar_select %p432, %s28, 0
      %s434 = smul.addr %s431, 2
      %s435 = sadd.s32 %s433, %s434
      %s436 = smul.addr %s435, 8
      %s437 = scalar_lea.vmem %s0, %s436
      %p438 = pneg %p58
      %p439 = pneg %p55
      %p440 = scmp.lt.s32.totalorder %s27, 1
      %s441 = scalar_select %p440, %s27, 1
      %p442 = scmp.lt.s32.totalorder %s28, 0
      %s443 = scalar_select %p442, %s28, 0
      %s444 = smul.addr %s441, 2
      %s445 = sadd.s32 %s443, %s444
      %s446 = smul.addr %s445, 8
      %s447 = scalar_lea.vmem %s1, %s446
      %p448 = pneg %p86
      %p449 = pneg %p83
      %p450 = scmp.lt.s32.totalorder %s27, 1
      %s451 = scalar_select %p450, %s27, 1
      %p452 = scmp.lt.s32.totalorder %s28, 0
      %s453 = scalar_select %p452, %s28, 0
      %s454 = sadd.s32 %s453, %s451
      %s455 = smul.addr %s454, 4
      %s456 = scalar_lea.vmem %s2, %s455
      %p457 = pneg %p114
      %p458 = pneg %p111
      %p459 = scmp.lt.s32.totalorder %s27, 1
      %s460 = scalar_select %p459, %s27, 1
      %p461 = scmp.lt.s32.totalorder %s28, 0
      %s462 = scalar_select %p461, %s28, 0
      %s463 = sadd.s32 %s462, %s460
      %s464 = smul.addr %s463, 4
      %s465 = scalar_lea.vmem %s3, %s464
      %p466 = pneg %p142
      %p467 = pneg %p139
      %p468 = pneg %p163
      %p469 = pneg %p160
      %p470 = pneg %p184
      %p471 = pneg %p181
      %p472 = pneg %p205
      %p473 = pneg %p202
      %p474 = pneg %p226
      %p475 = pneg %p223
      %p476 = pneg %p247
      %p477 = pneg %p244
      %p478 = pneg %p268
      %p479 = pneg %p265
      %p480 = pneg %p289
      %p481 = pneg %p286
      %p482 = pneg %p310
      %p483 = pneg %p307
      %p484 = pneg %p338
      %p485 = pneg %p335
      %p486 = scmp.lt.s32.totalorder %s27, 1
      %s487 = scalar_select %p486, %s27, 1
      %p488 = scmp.lt.s32.totalorder %s28, 0
      %s489 = scalar_select %p488, %s28, 0
      %s490 = sadd.s32 %s489, %s487
      %s491 = smul.addr %s490, 4
      %s492 = scalar_lea.vmem %s12, %s491
      %p493 = scmp.lt.s32.totalorder %s27, 1
      %s494 = scalar_select %p493, %s27, 1
      %p495 = scmp.lt.s32.totalorder %s28, 0
      %s496 = scalar_select %p495, %s28, 0
      %s497 = smul.addr %s494, 2
      %s498 = sadd.s32 %s496, %s497
      %s499 = smul.addr %s498, 8
      %s500 = scalar_lea.vmem %s0, %s499
      %p501 = scmp.lt.s32.totalorder %s27, 1
      %s502 = scalar_select %p501, %s27, 1
      %p503 = scmp.lt.s32.totalorder %s28, 0
      %s504 = scalar_select %p503, %s28, 0
      %s505 = smul.addr %s502, 2
      %s506 = sadd.s32 %s504, %s505
      %s507 = smul.addr %s506, 8
      %s508 = scalar_lea.vmem %s1, %s507
      %p509 = scmp.lt.s32.totalorder %s27, 1
      %s510 = scalar_select %p509, %s27, 1
      %p511 = scmp.lt.s32.totalorder %s28, 0
      %s512 = scalar_select %p511, %s28, 0
      %s513 = sadd.s32 %s512, %s510
      %s514 = smul.addr %s513, 4
      %s515 = scalar_lea.vmem %s2, %s514
      %p516 = scmp.lt.s32.totalorder %s27, 1
      %s517 = scalar_select %p516, %s27, 1
      %p518 = scmp.lt.s32.totalorder %s28, 0
      %s519 = scalar_select %p518, %s28, 0
      %s520 = sadd.s32 %s519, %s517
      %s521 = smul.addr %s520, 4
      %s522 = scalar_lea.vmem %s3, %s521
      %p523 = scmp.lt.s32.totalorder %s27, 1
      %s524 = scalar_select %p523, %s27, 1
      %p525 = scmp.lt.s32.totalorder %s28, 0
      %s526 = scalar_select %p525, %s28, 0
      %s527 = sadd.s32 %s526, %s524
      %s528 = smul.addr %s527, 4
      %s529 = scalar_lea.vmem %s12, %s528
      %v530 = vld [vmem:[%s4] sm:$0xf]
      %v531 = vld [vmem:[%s500] sm:$0xff]
      %v532 = vld [vmem:[%s500 + $0x8] sm:$0xff]
      %v533 = vld [vmem:[%s5] sm:$0xf]
      %535 = vset.pattern.permute.xlu0 0
      %536 = vperm.xlu0 %535, %v533
      %v537 = vpop.permute.xlu0 %536
      %vm539 = vcmask 130048
      %v541 = vsel %vm539, %v530, 0
      %543 = vmatpush.msra.mxu0 0.0
      %544 = vmatpush.msra.mxu0 0.0
      %545 = vmatpush.msra.mxu0 0.0
      %546 = vmatpush.msra.mxu0 0.0
      %547 = vmatpush.msra.mxu0 0.0
      %548 = vmatpush.msra.mxu0 0.0
      %549 = vmatpush.msra.mxu0 0.0
      %550 = vmatpush.msra.mxu0 0.0
      %551 = vmatpush.msra.mxu0 0.0
      %552 = vmatpush.msra.mxu0 0.0
      %553 = vmatpush.msra.mxu0 0.0
      %554 = vmatpush.msra.mxu0 0.0
      %555 = vmatpush.msra.mxu0 0.0
      %556 = vmatpush.msra.mxu0 0.0
      %557 = vmatpush.msra.mxu0 %v532
      %558 = vmatpush.msra.mxu0 %v531
      %559 = vmatmul.f32.gmra.mxu0 %v541
      %v560 = vpop.f32.mrf.mxu0
      %v561 = vadd.f32 %v537, %v560
      %562 = vdwg.mxu0
      %v563 = vld [vmem:[%s6] sm:$0xf]
      %v564 = vld [vmem:[%s508] sm:$0xff]
      %v565 = vld [vmem:[%s508 + $0x8] sm:$0xff]
      %v566 = vld [vmem:[%s7] sm:$0xf]
      %568 = vset.pattern.permute.xlu0 0
      %569 = vperm.xlu0 %568, %v566
      %v570 = vpop.permute.xlu0 %569
      %v573 = vsel %vm539, %v563, 0
      %575 = vmatpush.msra.mxu0 0.0
      %576 = vmatpush.msra.mxu0 0.0
      %577 = vmatpush.msra.mxu0 0.0
      %578 = vmatpush.msra.mxu0 0.0
      %579 = vmatpush.msra.mxu0 0.0
      %580 = vmatpush.msra.mxu0 0.0
      %581 = vmatpush.msra.mxu0 0.0
      %582 = vmatpush.msra.mxu0 0.0
      %583 = vmatpush.msra.mxu0 0.0
      %584 = vmatpush.msra.mxu0 0.0
      %585 = vmatpush.msra.mxu0 0.0
      %586 = vmatpush.msra.mxu0 0.0
      %587 = vmatpush.msra.mxu0 0.0
      %588 = vmatpush.msra.mxu0 0.0
      %589 = vmatpush.msra.mxu0 %v565
      %590 = vmatpush.msra.mxu0 %v564
      %591 = vmatmul.f32.gmra.mxu0 %v573
      %v592 = vpop.f32.mrf.mxu0
      %v593 = vadd.f32 %v570, %v592
      %594 = vdwg.mxu0
      %v595 = vld [vmem:[%s8] sm:$0xf]
      %v596 = vld [vmem:[%s515] sm:$0xf]
      %v597 = vld [vmem:[%s9] sm:$0xf]
      %v598 = vmul.f32 %v561, %v593
      %vm599 = vcmask 31744
      %v601 = vsel %vm599, %v597, 0
      %vm603 = vcmask 1043456
      %v605 = vsel %vm603, %v598, 0
      %607 = vmatpush.msra.mxu0 0.0
      %608 = vmatpush.msra.mxu0 0.0
      %609 = vmatpush.msra.mxu0 0.0
      %610 = vmatpush.msra.mxu0 0.0
      %611 = vmatpush.msra.mxu0 0.0
      %612 = vmatpush.msra.mxu0 0.0
      %613 = vmatpush.msra.mxu0 0.0
      %614 = vmatpush.msra.mxu0 0.0
      %615 = vmatpush.msra.mxu0 0.0
      %616 = vmatpush.msra.mxu0 0.0
      %617 = vmatpush.msra.mxu0 0.0
      %618 = vmatpush.msra.mxu0 0.0
      %619 = vmatpush.msra.mxu0 0.0
      %620 = vmatpush.msra.mxu0 0.0
      %621 = vmatpush.msra.mxu0 0.0
      %622 = vmatpush.msra.mxu0 %v605
      %623 = vmatmul.f32.gmra.mxu0 %v601
      %v624 = vpop.f32.mrf.mxu0
      %v625 = vadd.f32 0.0, %v624
      %626 = vdwg.mxu0
      %v628 = vsel %vm599, %v595, 0
      %v631 = vsel %vm603, %v596, 0
      %633 = vmatpush.msra.mxu0 0.0
      %634 = vmatpush.msra.mxu0 0.0
      %635 = vmatpush.msra.mxu0 0.0
      %636 = vmatpush.msra.mxu0 0.0
      %637 = vmatpush.msra.mxu0 0.0
      %638 = vmatpush.msra.mxu0 0.0
      %639 = vmatpush.msra.mxu0 0.0
      %640 = vmatpush.msra.mxu0 0.0
      %641 = vmatpush.msra.mxu0 0.0
      %642 = vmatpush.msra.mxu0 0.0
      %643 = vmatpush.msra.mxu0 0.0
      %644 = vmatpush.msra.mxu0 0.0
      %645 = vmatpush.msra.mxu0 0.0
      %646 = vmatpush.msra.mxu0 0.0
      %647 = vmatpush.msra.mxu0 0.0
      %648 = vmatpush.msra.mxu0 %v631
      %649 = vmatmul.f32.gmra.mxu0 %v628
      %v650 = vpop.f32.mrf.mxu0
      %v651 = vadd.f32 %v625, %v650
      %652 = vdwg.mxu0
      %v653 = vld [vmem:[%s10] sm:$0xf]
      %v654 = vld [vmem:[%s522] sm:$0xf]
      %v656 = vsel %vm599, %v653, 0
      %v659 = vsel %vm603, %v654, 0
      %661 = vmatpush.msra.mxu0 0.0
      %662 = vmatpush.msra.mxu0 0.0
      %663 = vmatpush.msra.mxu0 0.0
      %664 = vmatpush.msra.mxu0 0.0
      %665 = vmatpush.msra.mxu0 0.0
      %666 = vmatpush.msra.mxu0 0.0
      %667 = vmatpush.msra.mxu0 0.0
      %668 = vmatpush.msra.mxu0 0.0
      %669 = vmatpush.msra.mxu0 0.0
      %670 = vmatpush.msra.mxu0 0.0
      %671 = vmatpush.msra.mxu0 0.0
      %672 = vmatpush.msra.mxu0 0.0
      %673 = vmatpush.msra.mxu0 0.0
      %674 = vmatpush.msra.mxu0 0.0
      %675 = vmatpush.msra.mxu0 0.0
      %676 = vmatpush.msra.mxu0 %v659
      %677 = vmatmul.f32.gmra.mxu0 %v656
      %v678 = vpop.f32.mrf.mxu0
      %v679 = vadd.f32 0.0, %v678
      %680 = vdwg.mxu0
      %v681 = vadd.f32 %v651, %v679
      %v682 = vld [vmem:[%s11] sm:$0xf]
      %684 = vset.pattern.permute.xlu0 0
      %685 = vperm.xlu0 %684, %v682
      %v686 = vpop.permute.xlu0 %685
      %v688 = vadd.f32 %v681, %v686
      %vm689 = vcmask 519168
      %690 = vst.msk [vmem:[%s529] sm:$0xf] %vm689, %v688
      %p691 = scmp.lt.s32.totalorder %s27, 1
      %s692 = scalar_select %p691, %s27, 1
      %p693 = scmp.lt.s32.totalorder %s28, 0
      %s694 = scalar_select %p693, %s28, 0
      %s695 = sadd.s32 %s694, %s692
      %s696 = smul.addr %s695, 4
      %s697 = scalar_lea.vmem %s12, %s696
      // Predicated region
      $region69: #{down2_forward.2} parent=67 // pred_check
        %p698 = pneg %p335
      $region70: #{down2_forward.2} parent=67 // pred_check_branch
        %700 = sbr.rel (%p698) target = $region72
      $region71: #{down2_forward.2} parent=67 // pred_region
        _
      $region72: #{down2_forward.2} parent=67 // pred_fallthru
        _
    $region68: #{down2_forward.2} parent=5 // pred_fallthru
      _
    %p701 = scmp.le.s32.totalorder 2, %s18
    // Predicated region
    $region73: #{down2_forward.2} parent=5 // pred_check
      %p702 = pneg %p701
    $region74: #{down2_forward.2} parent=5 // pred_check_branch
      %704 = sbr.rel (%p702) target = $region76
    $region75: #{down2_forward.2} parent=5 // pred_region
      %s705 = ssub.s32 %s18, 2
      // Predicated region
      $region77: #{down2_forward.2} parent=75 // pred_check
        %p706 = pneg %p341
      $region78: #{down2_forward.2} parent=75 // pred_check_branch
        %708 = sbr.rel (%p706) target = $region80
      $region79: #{down2_forward.2} parent=75 // pred_region
        %p709 = scmp.lt.s32.totalorder %s29, 1
        %s710 = scalar_select %p709, %s29, 1
        %p711 = scmp.lt.s32.totalorder %s30, 0
        %s712 = scalar_select %p711, %s30, 0
        %s713 = sadd.s32 %s712, %s710
        %s714 = smul.addr %s713, 4
        %s715 = scalar_lea.vmem %s12, %s714
      $region80: #{down2_forward.2} parent=75 // pred_fallthru
        _
    $region76: #{down2_forward.2} parent=5 // pred_fallthru
      _
  $region6: #{down2_forward.2} parent=0 // loop_footer
    %s22 = sadd.s32 1, %s18
  $region7: #{down2_forward.2} parent=0 // loop_footer_branch
    %17 = sbr.rel target = $region3
  $region8: #{down2_forward.2} parent=0 // loop_exit
    _

// kernel: down2_forward.3
$region0: #{down2_forward.3}
  #allocation0 [shape = 'u32[]', space=smem, size = 0x4, offset = 0x4, fixed_abs, tag = 'smem constant byte address 0x4 - core index']
  #allocation1 [shape = 'u32[72,128]{1,0:T(1,128)}', space=vmem, size = 0x9000, scoped, tag = 'internal scratch']
  #allocation2 [shape = 'f32[4,112]{1,0:T(4,128)}', space=vmem, size = 0x800, scoped, tag = 'scratch operand']
  #allocation3 [shape = 'f32[8,96]{1,0:T(8,128)}', space=vmem, size = 0x1000, scoped, tag = 'scratch operand']
  %s0 = inlined_call_operand.vmem [shape: f32[2,4,64], index: 0, kind: input, shape index: {}, may-alias: {0,1,2}]
  %s1 = inlined_call_operand.vmem [shape: f32[2,4,64], index: 1, kind: input, shape index: {}, may-alias: {0,1,2}]
  %s2 = inlined_call_operand.vmem [shape: f32[2,4,64], index: 2, kind: input, shape index: {}, may-alias: {0,1,2}]
  %s3 = inlined_call_operand.vmem [shape: f32[8,36], index: 3, kind: input, shape index: {}]
  %s4 = inlined_call_operand.vmem [shape: f32[8,1], index: 4, kind: input, shape index: {}]
  %s5 = inlined_call_operand.vmem [shape: f32[8,72], index: 5, kind: input, shape index: {}]
  %s6 = inlined_call_operand.vmem [shape: f32[8,1], index: 6, kind: input, shape index: {}]
  %s7 = inlined_call_operand.vmem [shape: f32[2,8,64], index: 7, kind: output, shape index: {}]
  %s8 = sld [smem:[#allocation0]]
  $region61: #{down2_forward.3} parent=0
    _
  %s10 = ssub.s32 1, %s8
  %s11 = scalar_select 0, %s10, %s8
  loop: start=0, step=1, limit=4
  $region2: #{down2_forward.3} parent=0 // loop_pre_header
    _
  $region3: #{down2_forward.3} parent=0 // loop_header
    %s13 = sphi 0, %s17
    %p14 = scmp.ge.s32.totalorder %s13, 4
    %s20 = sphi 0, %s32
    %s21 = sphi 0, %s28
    %s22 = sphi 0, %s20
    %s23 = sphi 0, %s21
    %s24 = sphi 0, %s22
    %s25 = sphi 0, %s23
    %s43 = sphi 0, %s45
    %s46 = sphi 0, %s43
    %s47 = sphi 0, %s46
    %s63 = sphi 0, %s47
    %s71 = sphi 0, %s73
    %s74 = sphi 0, %s71
    %s75 = sphi 0, %s74
    %s91 = sphi 0, %s75
    %s105 = sphi 0, %s107
    %s108 = sphi 0, %s105
    %s109 = sphi 0, %s108
    %s125 = sphi 0, %s109
    %s129 = sphi 0, %s129
    %s131 = sphi 0, %s129
    %s132 = sphi 0, %s131
    %s146 = sphi 0, %s132
    %s150 = sphi 0, %s150
    %s152 = sphi 0, %s150
    %s153 = sphi 0, %s152
    %s167 = sphi 0, %s153
    %s171 = sphi 0, %s171
    %s173 = sphi 0, %s171
    %s174 = sphi 0, %s173
    %s188 = sphi 0, %s174
    %s192 = sphi 0, %s192
    %s194 = sphi 0, %s192
    %s195 = sphi 0, %s194
    %s209 = sphi 0, %s195
    %s217 = sphi 0, %s219
    %s220 = sphi 0, %s217
    %s221 = sphi 0, %s220
    %s237 = sphi 0, %s221
  $region4: #{down2_forward.3} parent=0 // loop_header_branch
    %16 = sbr.rel (%p14) target = $region8
  $region5: #{down2_forward.3} parent=0 // loop_body
    %s18 = ssub.s32 %s13, 1
    %s19 = ssub.s32 %s13, 2
    %s26 = sadd.s32 1, %s21
    %p27 = scmp.ge.s32.totalorder %s26, 1
    %s28 = scalar_select %p27, 0, %s26
    %s29 = sadd.s32 1, %s20
    %s30 = scalar_select %p27, %s29, %s20
    %p31 = scmp.ge.s32.totalorder %s30, 2
    %s32 = scalar_select %p31, 0, %s30
    %s33 = ssub.s32 %s21, 1
    %p34 = scmp.gt.s32.totalorder %s33, 0
    %s35 = scalar_select %p34, %s33, 0
    %s36 = ssub.s32 %s28, 1
    %p37 = scmp.gt.s32.totalorder %s36, 0
    %s38 = scalar_select %p37, %s36, 0
    %s39 = ssub.s32 %s20, %s32
    %s40 = ssub.s32 %s35, %s38
    %s41 = sor.u32 %s39, %s40
    %p42 = scmp.eq.s32.totalorder %s41, 0
    %s44 = sadd.s32 %s43, 1
    %s45 = scalar_select %p42, %s43, %s44
    %p48 = pneg %p42
    %p49 = scmp.eq.s32.totalorder %s13, 1
    %p50 = por %p48, %p49
    %p51 = scmp.ne.s32.totalorder %s43, %s46
    %p52 = scmp.eq.s32.totalorder %s13, 0
    %p53 = por %p51, %p52
    %p54 = scmp.ne.s32.totalorder %s43, %s46
    %p55 = scmp.eq.s32.totalorder %s18, 1
    %p56 = por %p54, %p55
    %p57 = scmp.ne.s32.totalorder %s46, %s47
    %p58 = scmp.eq.s32.totalorder %s18, 0
    %p59 = por %p57, %p58
    %p60 = scmp.ne.s32.totalorder %s46, %s47
    %p61 = scmp.eq.s32.totalorder %s19, 1
    %p62 = por %p60, %p61
    %p64 = scmp.ne.s32.totalorder %s47, %s63
    %p65 = scmp.eq.s32.totalorder %s19, 0
    %p66 = por %p64, %p65
    %s67 = ssub.s32 %s20, %s32
    %s68 = ssub.s32 %s21, %s28
    %s69 = sor.u32 %s67, %s68
    %p70 = scmp.eq.s32.totalorder %s69, 0
    %s72 = sadd.s32 %s71, 1
    %s73 = scalar_select %p70, %s71, %s72
    %p76 = pneg %p70
    %p77 = scmp.eq.s32.totalorder %s13, 1
    %p78 = por %p76, %p77
    %p79 = scmp.ne.s32.totalorder %s71, %s74
    %p80 = scmp.eq.s32.totalorder %s13, 0
    %p81 = por %p79, %p80
    %p82 = scmp.ne.s32.totalorder %s71, %s74
    %p83 = scmp.eq.s32.totalorder %s18, 1
    %p84 = por %p82, %p83
    %p85 = scmp.ne.s32.totalorder %s74, %s75
    %p86 = scmp.eq.s32.totalorder %s18, 0
    %p87 = por %p85, %p86
    %p88 = scmp.ne.s32.totalorder %s74, %s75
    %p89 = scmp.eq.s32.totalorder %s19, 1
    %p90 = por %p88, %p89
    %p92 = scmp.ne.s32.totalorder %s75, %s91
    %p93 = scmp.eq.s32.totalorder %s19, 0
    %p94 = por %p92, %p93
    %s95 = sadd.s32 %s21, 1
    %p96 = scmp.lt.s32.totalorder %s95, 0
    %s97 = scalar_select %p96, %s95, 0
    %s98 = sadd.s32 %s28, 1
    %p99 = scmp.lt.s32.totalorder %s98, 0
    %s100 = scalar_select %p99, %s98, 0
    %s101 = ssub.s32 %s20, %s32
    %s102 = ssub.s32 %s97, %s100
    %s103 = sor.u32 %s101, %s102
    %p104 = scmp.eq.s32.totalorder %s103, 0
    %s106 = sadd.s32 %s105, 1
    %s107 = scalar_select %p104, %s105, %s106
    %p110 = pneg %p104
    %p111 = scmp.eq.s32.totalorder %s13, 1
    %p112 = por %p110, %p111
    %p113 = scmp.ne.s32.totalorder %s105, %s108
    %p114 = scmp.eq.s32.totalorder %s13, 0
    %p115 = por %p113, %p114
    %p116 = scmp.ne.s32.totalorder %s105, %s108
    %p117 = scmp.eq.s32.totalorder %s18, 1
    %p118 = por %p116, %p117
    %p119 = scmp.ne.s32.totalorder %s108, %s109
    %p120 = scmp.eq.s32.totalorder %s18, 0
    %p121 = por %p119, %p120
    %p122 = scmp.ne.s32.totalorder %s108, %s109
    %p123 = scmp.eq.s32.totalorder %s19, 1
    %p124 = por %p122, %p123
    %p126 = scmp.ne.s32.totalorder %s109, %s125
    %p127 = scmp.eq.s32.totalorder %s19, 0
    %p128 = por %p126, %p127
    %s130 = sadd.s32 %s129, 1
    %p133 = scmp.eq.s32.totalorder %s13, 1
    %p134 = scmp.ne.s32.totalorder %s129, %s131
    %p135 = scmp.eq.s32.totalorder %s13, 0
    %p136 = por %p134, %p135
    %p137 = scmp.ne.s32.totalorder %s129, %s131
    %p138 = scmp.eq.s32.totalorder %s18, 1
    %p139 = por %p137, %p138
    %p140 = scmp.ne.s32.totalorder %s131, %s132
    %p141 = scmp.eq.s32.totalorder %s18, 0
    %p142 = por %p140, %p141
    %p143 = scmp.ne.s32.totalorder %s131, %s132
    %p144 = scmp.eq.s32.totalorder %s19, 1
    %p145 = por %p143, %p144
    %p147 = scmp.ne.s32.totalorder %s132, %s146
    %p148 = scmp.eq.s32.totalorder %s19, 0
    %p149 = por %p147, %p148
    %s151 = sadd.s32 %s150, 1
    %p154 = scmp.eq.s32.totalorder %s13, 1
    %p155 = scmp.ne.s32.totalorder %s150, %s152
    %p156 = scmp.eq.s32.totalorder %s13, 0
    %p157 = por %p155, %p156
    %p158 = scmp.ne.s32.totalorder %s150, %s152
    %p159 = scmp.eq.s32.totalorder %s18, 1
    %p160 = por %p158, %p159
    %p161 = scmp.ne.s32.totalorder %s152, %s153
    %p162 = scmp.eq.s32.totalorder %s18, 0
    %p163 = por %p161, %p162
    %p164 = scmp.ne.s32.totalorder %s152, %s153
    %p165 = scmp.eq.s32.totalorder %s19, 1
    %p166 = por %p164, %p165
    %p168 = scmp.ne.s32.totalorder %s153, %s167
    %p169 = scmp.eq.s32.totalorder %s19, 0
    %p170 = por %p168, %p169
    %s172 = sadd.s32 %s171, 1
    %p175 = scmp.eq.s32.totalorder %s13, 1
    %p176 = scmp.ne.s32.totalorder %s171, %s173
    %p177 = scmp.eq.s32.totalorder %s13, 0
    %p178 = por %p176, %p177
    %p179 = scmp.ne.s32.totalorder %s171, %s173
    %p180 = scmp.eq.s32.totalorder %s18, 1
    %p181 = por %p179, %p180
    %p182 = scmp.ne.s32.totalorder %s173, %s174
    %p183 = scmp.eq.s32.totalorder %s18, 0
    %p184 = por %p182, %p183
    %p185 = scmp.ne.s32.totalorder %s173, %s174
    %p186 = scmp.eq.s32.totalorder %s19, 1
    %p187 = por %p185, %p186
    %p189 = scmp.ne.s32.totalorder %s174, %s188
    %p190 = scmp.eq.s32.totalorder %s19, 0
    %p191 = por %p189, %p190
    %s193 = sadd.s32 %s192, 1
    %p196 = scmp.eq.s32.totalorder %s13, 1
    %p197 = scmp.ne.s32.totalorder %s192, %s194
    %p198 = scmp.eq.s32.totalorder %s13, 0
    %p199 = por %p197, %p198
    %p200 = scmp.ne.s32.totalorder %s192, %s194
    %p201 = scmp.eq.s32.totalorder %s18, 1
    %p202 = por %p200, %p201
    %p203 = scmp.ne.s32.totalorder %s194, %s195
    %p204 = scmp.eq.s32.totalorder %s18, 0
    %p205 = por %p203, %p204
    %p206 = scmp.ne.s32.totalorder %s194, %s195
    %p207 = scmp.eq.s32.totalorder %s19, 1
    %p208 = por %p206, %p207
    %p210 = scmp.ne.s32.totalorder %s195, %s209
    %p211 = scmp.eq.s32.totalorder %s19, 0
    %p212 = por %p210, %p211
    %s213 = ssub.s32 %s20, %s32
    %s214 = ssub.s32 %s21, %s28
    %s215 = sor.u32 %s213, %s214
    %p216 = scmp.eq.s32.totalorder %s215, 0
    %s218 = sadd.s32 %s217, 1
    %s219 = scalar_select %p216, %s217, %s218
    %p222 = pneg %p216
    %p223 = scmp.eq.s32.totalorder %s13, 1
    %p224 = por %p222, %p223
    %p225 = scmp.ne.s32.totalorder %s217, %s220
    %p226 = scmp.eq.s32.totalorder %s13, 0
    %p227 = por %p225, %p226
    %p228 = scmp.ne.s32.totalorder %s217, %s220
    %p229 = scmp.eq.s32.totalorder %s18, 1
    %p230 = por %p228, %p229
    %p231 = scmp.ne.s32.totalorder %s220, %s221
    %p232 = scmp.eq.s32.totalorder %s18, 0
    %p233 = por %p231, %p232
    %p234 = scmp.ne.s32.totalorder %s220, %s221
    %p235 = scmp.eq.s32.totalorder %s19, 1
    %p236 = por %p234, %p235
    %p238 = scmp.ne.s32.totalorder %s221, %s237
    %p239 = scmp.eq.s32.totalorder %s19, 0
    %p240 = por %p238, %p239
    %p241 = scmp.le.s32.totalorder 1, %s13
    %p242 = scmp.lt.s32.totalorder %s13, 3
    %p243 = pnand %p241, %p242
    %p244 = pneg %p243
    // Predicated region
    $region9: #{down2_forward.3} parent=5 // pred_check
      _
    $region10: #{down2_forward.3} parent=5 // pred_check_branch
      %246 = sbr.rel (%p243) target = $region12
    $region11: #{down2_forward.3} parent=5 // pred_region
      %s247 = ssub.s32 %s13, 1
      // Predicated region
      $region13: #{down2_forward.3} parent=11 // pred_check
        %p248 = pneg %p142
      $region14: #{down2_forward.3} parent=11 // pred_check_branch
        %250 = sbr.rel (%p248) target = $region16
      $region15: #{down2_forward.3} parent=11 // pred_region
        _
      $region16: #{down2_forward.3} parent=11 // pred_fallthru
        _
      // Predicated region
      $region17: #{down2_forward.3} parent=11 // pred_check
        %p251 = pneg %p163
      $region18: #{down2_forward.3} parent=11 // pred_check_branch
        %253 = sbr.rel (%p251) target = $region20
      $region19: #{down2_forward.3} parent=11 // pred_region
        _
      $region20: #{down2_forward.3} parent=11 // pred_fallthru
        _
      // Predicated region
      $region21: #{down2_forward.3} parent=11 // pred_check
        %p254 = pneg %p184
      $region22: #{down2_forward.3} parent=11 // pred_check_branch
        %256 = sbr.rel (%p254) target = $region24
      $region23: #{down2_forward.3} parent=11 // pred_region
        _
      $region24: #{down2_forward.3} parent=11 // pred_fallthru
        _
      // Predicated region
      $region25: #{down2_forward.3} parent=11 // pred_check
        %p257 = pneg %p205
      $region26: #{down2_forward.3} parent=11 // pred_check_branch
        %259 = sbr.rel (%p257) target = $region28
      $region27: #{down2_forward.3} parent=11 // pred_region
        _
      $region28: #{down2_forward.3} parent=11 // pred_fallthru
        _
    $region12: #{down2_forward.3} parent=5 // pred_fallthru
      _
    %p260 = scmp.lt.s32.totalorder %s13, 2
    // Predicated region
    $region29: #{down2_forward.3} parent=5 // pred_check
      %p261 = pneg %p260
    $region30: #{down2_forward.3} parent=5 // pred_check_branch
      %263 = sbr.rel (%p261) target = $region32
    $region31: #{down2_forward.3} parent=5 // pred_region
      // Predicated region
      $region33: #{down2_forward.3} parent=31 // pred_check
        %p264 = pneg %p53
      $region34: #{down2_forward.3} parent=31 // pred_check_branch
        %266 = sbr.rel (%p264) target = $region36
      $region35: #{down2_forward.3} parent=31 // pred_region
        %s267 = ssub.s32 %s21, 1
        %p268 = scmp.gt.s32.totalorder %s267, 0
        %s269 = scalar_select %p268, %s267, 0
        %p270 = scmp.lt.s32.totalorder %s20, 1
        %s271 = scalar_select %p270, %s20, 1
        %p272 = scmp.lt.s32.totalorder %s269, 0
        %s273 = scalar_select %p272, %s269, 0
        %s274 = sadd.s32 %s273, %s271
        %s275 = smul.addr %s274, 4
        %s276 = scalar_lea.vmem %s0, %s275
        %s277 = ssub.s32 %s21, 1
        %p278 = scmp.gt.s32.totalorder %s277, 0
        %s279 = scalar_select %p278, %s277, 0
      $region36: #{down2_forward.3} parent=31 // pred_fallthru
        _
      // Predicated region
      $region37: #{down2_forward.3} parent=31 // pred_check
        %p280 = pneg %p81
      $region38: #{down2_forward.3} parent=31 // pred_check_branch
        %282 = sbr.rel (%p280) target = $region40
      $region39: #{down2_forward.3} parent=31 // pred_region
        %p283 = scmp.lt.s32.totalorder %s20, 1
        %s284 = scalar_select %p283, %s20, 1
        %p285 = scmp.lt.s32.totalorder %s21, 0
        %s286 = scalar_select %p285, %s21, 0
        %s287 = sadd.s32 %s286, %s284
        %s288 = smul.addr %s287, 4
        %s289 = scalar_lea.vmem %s1, %s288
      $region40: #{down2_forward.3} parent=31 // pred_fallthru
        _
      // Predicated region
      $region41: #{down2_forward.3} parent=31 // pred_check
        %p290 = pneg %p115
      $region42: #{down2_forward.3} parent=31 // pred_check_branch
        %292 = sbr.rel (%p290) target = $region44
      $region43: #{down2_forward.3} parent=31 // pred_region
        %s293 = sadd.s32 %s21, 1
        %p294 = scmp.lt.s32.totalorder %s293, 0
        %s295 = scalar_select %p294, %s293, 0
        %p296 = scmp.lt.s32.totalorder %s20, 1
        %s297 = scalar_select %p296, %s20, 1
        %p298 = scmp.lt.s32.totalorder %s295, 0
        %s299 = scalar_select %p298, %s295, 0
        %s300 = sadd.s32 %s299, %s297
        %s301 = smul.addr %s300, 4
        %s302 = scalar_lea.vmem %s2, %s301
        %s303 = sadd.s32 %s21, 1
        %p304 = scmp.lt.s32.totalorder %s303, 0
        %s305 = scalar_select %p304, %s303, 0
      $region44: #{down2_forward.3} parent=31 // pred_fallthru
        _
    $region32: #{down2_forward.3} parent=5 // pred_fallthru
      _
    %p306 = scmp.le.s32.totalorder 1, %s13
    %p307 = scmp.lt.s32.totalorder %s13, 3
    %p308 = pnand %p306, %p307
    %p309 = pneg %p308
    // Predicated region
    $region45: #{down2_forward.3} parent=5 // pred_check
      _
    $region46: #{down2_forward.3} parent=5 // pred_check_branch
      %311 = sbr.rel (%p308) target = $region48
    $region47: #{down2_forward.3} parent=5 // pred_region
      %s312 = ssub.s32 %s13, 1
      %s313 = ssub.s32 %s23, 1
      %p314 = scmp.gt.s32.totalorder %s313, 0
      %s315 = scalar_select %p314, %s313, 0
      %p316 = scmp.lt.s32.totalorder %s22, 1
      %s317 = scalar_select %p316, %s22, 1
      %p318 = scmp.lt.s32.totalorder %s315, 0
      %s319 = scalar_select %p318, %s315, 0
      %s320 = sadd.s32 %s319, %s317
      %s321 = smul.addr %s320, 4
      %s322 = scalar_lea.vmem %s0, %s321
      %p323 = pneg %p59
      %p324 = pneg %p56
      %p325 = scmp.lt.s32.totalorder %s22, 1
      %s326 = scalar_select %p325, %s22, 1
      %p327 = scmp.lt.s32.totalorder %s23, 0
      %s328 = scalar_select %p327, %s23, 0
      %s329 = sadd.s32 %s328, %s326
      %s330 = smul.addr %s329, 4
      %s331 = scalar_lea.vmem %s1, %s330
      %p332 = pneg %p87
      %p333 = pneg %p84
      %s334 = sadd.s32 %s23, 1
      %p335 = scmp.lt.s32.totalorder %s334, 0
      %s336 = scalar_select %p335, %s334, 0
      %p337 = scmp.lt.s32.totalorder %s22, 1
      %s338 = scalar_select %p337, %s22, 1
      %p339 = scmp.lt.s32.totalorder %s336, 0
      %s340 = scalar_select %p339, %s336, 0
      %s341 = sadd.s32 %s340, %s338
      %s342 = smul.addr %s341, 4
      %s343 = scalar_lea.vmem %s2, %s342
      %p344 = pneg %p121
      %p345 = pneg %p118
      %p346 = pneg %p142
      %p347 = pneg %p139
      %p348 = pneg %p163
      %p349 = pneg %p160
      %p350 = pneg %p184
      %p351 = pneg %p181
      %p352 = pneg %p205
      %p353 = pneg %p202
      %p354 = pneg %p233
      %p355 = pneg %p230
      %p356 = scmp.lt.s32.totalorder %s22, 1
      %s357 = scalar_select %p356, %s22, 1
      %p358 = scmp.lt.s32.totalorder %s23, 0
      %s359 = scalar_select %p358, %s23, 0
      %s360 = sadd.s32 %s359, %s357
      %s361 = smul.addr %s360, 8
      %s362 = scalar_lea.vmem %s7, %s361
      %s363 = ssub.s32 %s23, 1
      %p364 = scmp.gt.s32.totalorder %s363, 0
      %s365 = scalar_select %p364, %s363, 0
      %p366 = scmp.lt.s32.totalorder %s22, 1
      %s367 = scalar_select %p366, %s22, 1
      %p368 = scmp.lt.s32.totalorder %s365, 0
      %s369 = scalar_select %p368, %s365, 0
      %s370 = sadd.s32 %s369, %s367
      %s371 = smul.addr %s370, 4
      %s372 = scalar_lea.vmem %s0, %s371
      %s373 = ssub.s32 %s23, 1
      %p374 = scmp.gt.s32.totalorder %s373, 0
      %s375 = scalar_select %p374, %s373, 0
      %p376 = scmp.lt.s32.totalorder %s22, 1
      %s377 = scalar_select %p376, %s22, 1
      %p378 = scmp.lt.s32.totalorder %s23, 0
      %s379 = scalar_select %p378, %s23, 0
      %s380 = sadd.s32 %s379, %s377
      %s381 = smul.addr %s380, 4
      %s382 = scalar_lea.vmem %s1, %s381
      %s383 = sadd.s32 %s23, 1
      %p384 = scmp.lt.s32.totalorder %s383, 0
      %s385 = scalar_select %p384, %s383, 0
      %p386 = scmp.lt.s32.totalorder %s22, 1
      %s387 = scalar_select %p386, %s22, 1
      %p388 = scmp.lt.s32.totalorder %s385, 0
      %s389 = scalar_select %p388, %s385, 0
      %s390 = sadd.s32 %s389, %s387
      %s391 = smul.addr %s390, 4
      %s392 = scalar_lea.vmem %s2, %s391
      %s393 = sadd.s32 %s23, 1
      %p394 = scmp.lt.s32.totalorder %s393, 0
      %s395 = scalar_select %p394, %s393, 0
      %p396 = scmp.lt.s32.totalorder %s22, 1
      %s397 = scalar_select %p396, %s22, 1
      %p398 = scmp.lt.s32.totalorder %s23, 0
      %s399 = scalar_select %p398, %s23, 0
      %s400 = sadd.s32 %s399, %s397
      %s401 = smul.addr %s400, 8
      %s402 = scalar_lea.vmem %s7, %s401
      %p403 = scmp.gt.s32.totalorder %s23, 0
      %s404 = scalar_select %p403, 1, 0
      %s405 = scvt.s32.f32 %s404
      %p406 = scmp.lt.s32.totalorder %s23, 0
      %s407 = scalar_select %p406, 1, 0
      %s408 = scvt.s32.f32 %s407
      %vm409 = vcmask 60416
      %410 = vst.msk [vmem:[#allocation2] sm:$0xf] %vm409, 0.0
      %v411 = vld [vmem:[%s372] sm:$0xf]
      %v412 = vstv %s405
      %v413 = vmul.f32 %v411, %v412
      %415 = vrot.lane.b32.xlu0 %v413, 88
      %v416 = vpop.permute.xlu0 %415
      %vm418 = vcmask 191552
      %419 = vst.msk [vmem:[#allocation2] sm:$0xf] %vm418, %v416
      %v420 = vld [vmem:[%s382] sm:$0xf]
      %422 = vrot.lane.b32.xlu0 %v420, 24
      %v423 = vpop.permute.xlu0 %422
      %vm425 = vcmask 715968
      %426 = vst.msk [vmem:[#allocation2] sm:$0xf] %vm425, %v423
      %v427 = vld [vmem:[%s392] sm:$0xf]
      %v428 = vstv %s408
      %v429 = vmul.f32 %v427, %v428
      %431 = vrot.lane.b32.xlu0 %v429, 88
      %v432 = vpop.permute.xlu0 %431
      %vm434 = vcmask 847552
      %435 = vst.msk [vmem:[#allocation2] sm:$0xf] %vm434, %v432
      %vm436 = vcmask 913216
      %437 = vst.msk [vmem:[#allocation2] sm:$0xf] %vm436, 0.0
      %v438 = vlaneseq
      %v439 = vand.u32 %v438, 127
      %vm440 = vcmp.lt.s32.totalorder %v439, 0
      %v441 = vsub.s32 0, %v439
      %v442 = vsel %vm440, %v441, %v439
      %v443 = vshrl.u32 %v442, 3
      %v444 = vand.u32 %v442, 7
      %v445 = vsub.s32 0, %v444
      %v446 = vsel %vm440, %v445, %v444
      %vm447 = vcmp.ne.s32.totalorder %v446, 0
      %vm448 = vcmp.lt.s32.totalorder %v446, 0
      %vm449 = vmand %vm448, %vm447
      %v450 = vadd.s32 %v446, 8
      %v451 = vsel %vm449, %v450, %v446
      %vm452 = vcmp.ne.s32.totalorder %v451, 0
      %v453 = vsel %vm452, 1, 0
      %v454 = vcvt.s32.f32 %v453
      %vm455 = vcmp.ne.s32.totalorder %v451, 7
      %v456 = vsel %vm455, 1, 0
      %v457 = vcvt.s32.f32 %v456
      %v458 = vld [vmem:[#allocation2] sm:$0xf]
      %460 = vrot.lane.b32.xlu0 %v454, 7
      %v461 = vpop.permute.xlu0 %460
      %v463 = vmul.f32 %v458, %v461
      %465 = vrot.lane.b32.xlu0 %v457, 9
      %v466 = vpop.permute.xlu0 %465
      %v468 = vmul.f32 %v458, %v466
      %469 = vrot.lane.b32.xlu0 %v454, 15
      %v470 = vpop.permute.xlu0 %469
      %v472 = vmul.f32 %v458, %v470
      %473 = vrot.lane.b32.xlu0 %v457, 17
      %v474 = vpop.permute.xlu0 %473
      %v476 = vmul.f32 %v458, %v474
      %477 = vrot.lane.b32.xlu0 %v454, 23
      %v478 = vpop.permute.xlu0 %477
      %v480 = vmul.f32 %v458, %v478
      %481 = vrot.lane.b32.xlu0 %v457, 25
      %v482 = vpop.permute.xlu0 %481
      %v484 = vmul.f32 %v458, %v482
      %v486 = vrot.slane %v458, 4
      %487 = vrot.lane.b32.xlu0 %v486, 127
      %v488 = vpop.permute.xlu0 %487
      %491 = vrot.lane.b32.xlu0 %v468, 126
      %v492 = vpop.permute.xlu0 %491
      %v495 = vrot.slane %v472, 4
      %496 = vrot.lane.b32.xlu0 %v495, 120
      %v497 = vpop.permute.xlu0 %496
      %499 = vrot.lane.b32.xlu0 %v458, 119
      %v500 = vpop.permute.xlu0 %499
      %v503 = vrot.slane %v476, 4
      %504 = vrot.lane.b32.xlu0 %v503, 118
      %v505 = vpop.permute.xlu0 %504
      %508 = vrot.lane.b32.xlu0 %v480, 112
      %v509 = vpop.permute.xlu0 %508
      %511 = vrot.lane.b32.xlu0 %v486, 111
      %v512 = vpop.permute.xlu0 %511
      %515 = vrot.lane.b32.xlu0 %v484, 110
      %v516 = vpop.permute.xlu0 %515
      %vm517 = vcmask 1043456
      %v518 = vsel %vm517, %v463, %v488
      %v519 = vsel %vm517, %v492, %v497
      %v520 = vsel %vm517, %v500, %v505
      %v521 = vsel %vm517, %v509, %v512
      %v522 = vld [vmem:[%s3] sm:$0xff]
      %v523 = vld [vmem:[%s4] sm:$0xff]
      %525 = vset.pattern.permute.xlu0 0
      %526 = vperm.xlu0 %525, %v523
      %v527 = vpop.permute.xlu0 %526
      %533 = vrot.lane.b32.xlu0 %v518, 121
      %v534 = vpop.permute.xlu0 %533
      %535 = vrot.lane.b32.xlu0 %v519, 121
      %v536 = vpop.permute.xlu0 %535
      %537 = vrot.lane.b32.xlu0 %v520, 121
      %v538 = vpop.permute.xlu0 %537
      %539 = vrot.lane.b32.xlu0 %v521, 121
      %v540 = vpop.permute.xlu0 %539
      %541 = vrot.lane.b32.xlu0 %v516, 121
      %v542 = vpop.permute.xlu0 %541
      %vm547 = vcmask 293888
      %v549 = vsel %vm547, %v522, 0
      %v551 = vsel %vm517, %v542, 0
      %553 = vmatpush.msra.mxu0 0.0
      %554 = vmatpush.msra.mxu0 0.0
      %555 = vmatpush.msra.mxu0 0.0
      %556 = vmatpush.msra.mxu0 0.0
      %557 = vmatpush.msra.mxu0 0.0
      %558 = vmatpush.msra.mxu0 0.0
      %559 = vmatpush.msra.mxu0 0.0
      %560 = vmatpush.msra.mxu0 0.0
      %561 = vmatpush.msra.mxu0 0.0
      %562 = vmatpush.msra.mxu0 0.0
      %563 = vmatpush.msra.mxu0 0.0
      %564 = vmatpush.msra.mxu0 %v551
      %565 = vmatpush.msra.mxu0 %v540
      %566 = vmatpush.msra.mxu0 %v538
      %567 = vmatpush.msra.mxu0 %v536
      %568 = vmatpush.msra.mxu0 %v534
      %569 = vmatmul.f32.gmra.mxu0 %v549
      %v570 = vpop.f32.mrf.mxu0
      %v571 = vadd.f32 %v527, %v570
      %572 = vdwg.mxu0
      %v573 = vmul.f32 %v571, 0.5
      %v574 = vmul.f32 %v571, 0.70710677
      %vm575 = vcmp.ge.f32.partialorder %v574, 0.0
      %v576 = vsel %vm575, 1.0, -1.0
      %v577 = vand.u32 2147483647, %v574
      %v578 = vmul.f32 %v577, 0.3275911
      %v579 = vadd.f32 %v578, 1.0
      %v580 = vrcp.pop %v579
      %v581 = vmul.f32 %v580, 1.0614054
      %v582 = vadd.f32 %v581, -1.4531521
      %v583 = vmul.f32 %v582, %v580
      %v584 = vadd.f32 %v583, 1.4214138
      %v585 = vmul.f32 %v584, %v580
      %v586 = vadd.f32 %v585, -0.28449672
      %v587 = vmul.f32 %v586, %v580
      %v588 = vadd.f32 %v587, 0.2548296
      %v589 = vmul.f32 %v588, %v580
      %v590 = vsub.f32 0.0, %v577
      %v591 = vmul.f32 %v590, %v577
      %v592 = vmul.f32 %v591, 1.442695
      %v593 = vpow.pop %v592
      %v594 = vmul.f32 %v589, %v593
      %v595 = vsub.f32 1.0, %v594
      %v596 = vmul.f32 %v576, %v595
      %v597 = vadd.f32 %v596, 1.0
      %v598 = vmul.f32 %v573, %v597
      %vm599 = vcmask 64512
      %600 = vst.msk [vmem:[#allocation3] sm:$0xff] %vm599, 0.0
      %v601 = vmul.f32 %v598, %v412
      %603 = vrot.lane.b32.xlu0 %v601, 8
      %v604 = vpop.permute.xlu0 %603
      %vm606 = vcmask 130112
      %607 = vst.msk [vmem:[#allocation3] sm:$0xff] %vm606, %v604
      %609 = vrot.lane.b32.xlu0 %v598, 8
      %v610 = vpop.permute.xlu0 %609
      %vm612 = vcmask 654464
      %613 = vst.msk [vmem:[#allocation3] sm:$0xff] %vm612, %v610
      %v614 = vmul.f32 %v598, %v428
      %616 = vrot.lane.b32.xlu0 %v614, 8
      %v617 = vpop.permute.xlu0 %616
      %vm619 = vcmask 720512
      %620 = vst.msk [vmem:[#allocation3] sm:$0xff] %vm619, %v617
      %vm621 = vcmask 786112
      %622 = vst.msk [vmem:[#allocation3] sm:$0xff] %vm621, 0.0
      %v623 = vld [vmem:[#allocation3] sm:$0xff]
      %v624 = vmul.f32 %v623, %v461
      %v625 = vmul.f32 %v623, %v466
      %v626 = vmul.f32 %v623, %v470
      %v627 = vmul.f32 %v623, %v474
      %v628 = vmul.f32 %v623, %v478
      %v629 = vmul.f32 %v623, %v482
      %631 = vrot.lane.b32.xlu0 %v623, 127
      %v632 = vpop.permute.xlu0 %631
      %634 = vrot.lane.b32.xlu0 %v625, 126
      %v635 = vpop.permute.xlu0 %634
      %637 = vrot.lane.b32.xlu0 %v626, 120
      %v638 = vpop.permute.xlu0 %637
      %639 = vrot.lane.b32.xlu0 %v623, 119
      %v640 = vpop.permute.xlu0 %639
      %642 = vrot.lane.b32.xlu0 %v627, 118
      %v643 = vpop.permute.xlu0 %642
      %645 = vrot.lane.b32.xlu0 %v628, 112
      %v646 = vpop.permute.xlu0 %645
      %647 = vrot.lane.b32.xlu0 %v623, 111
      %v648 = vpop.permute.xlu0 %647
      %650 = vrot.lane.b32.xlu0 %v629, 110
      %v651 = vpop.permute.xlu0 %650
      %v652 = vld [vmem:[%s5] sm:$0xff]
      %v653 = vld [vmem:[%s6] sm:$0xff]
      %655 = vset.pattern.permute.xlu0 0
      %656 = vperm.xlu0 %655, %v653
      %v657 = vpop.permute.xlu0 %656
      %660 = vrot.lane.b32.xlu0 %v624, 121
      %v661 = vpop.permute.xlu0 %660
      %662 = vrot.lane.b32.xlu0 %v632, 121
      %v663 = vpop.permute.xlu0 %662
      %664 = vrot.lane.b32.xlu0 %v635, 121
      %v665 = vpop.permute.xlu0 %664
      %666 = vrot.lane.b32.xlu0 %v638, 121
      %v667 = vpop.permute.xlu0 %666
      %668 = vrot.lane.b32.xlu0 %v640, 121
      %v669 = vpop.permute.xlu0 %668
      %670 = vrot.lane.b32.xlu0 %v643, 121
      %v671 = vpop.permute.xlu0 %670
      %672 = vrot.lane.b32.xlu0 %v646, 121
      %v673 = vpop.permute.xlu0 %672
      %674 = vrot.lane.b32.xlu0 %v648, 121
      %v675 = vpop.permute.xlu0 %674
      %676 = vrot.lane.b32.xlu0 %v651, 121
      %v677 = vpop.permute.xlu0 %676
      %vm687 = vcmask 588800
      %v689 = vsel %vm687, %v652, 0
      %691 = vmatpush.msra.mxu0 0.0
      %692 = vmatpush.msra.mxu0 0.0
      %693 = vmatpush.msra.mxu0 0.0
      %694 = vmatpush.msra.mxu0 0.0
      %695 = vmatpush.msra.mxu0 0.0
      %696 = vmatpush.msra.mxu0 0.0
      %697 = vmatpush.msra.mxu0 0.0
      %698 = vmatpush.msra.mxu0 %v677
      %699 = vmatpush.msra.mxu0 %v675
      %700 = vmatpush.msra.mxu0 %v673
      %701 = vmatpush.msra.mxu0 %v671
      %702 = vmatpush.msra.mxu0 %v669
      %703 = vmatpush.msra.mxu0 %v667
      %704 = vmatpush.msra.mxu0 %v665
      %705 = vmatpush.msra.mxu0 %v663
      %706 = vmatpush.msra.mxu0 %v661
      %707 = vmatmul.f32.gmra.mxu0 %v689
      %v708 = vpop.f32.mrf.mxu0
      %v709 = vadd.f32 %v657, %v708
      %710 = vdwg.mxu0
      %v711 = vmul.f32 %v709, 0.5
      %v712 = vmul.f32 %v709, 0.70710677
      %vm713 = vcmp.ge.f32.partialorder %v712, 0.0
      %v714 = vsel %vm713, 1.0, -1.0
      %v715 = vand.u32 2147483647, %v712
      %v716 = vmul.f32 %v715, 0.3275911
      %v717 = vadd.f32 %v716, 1.0
      %v718 = vrcp.pop %v717
      %v719 = vmul.f32 %v718, 1.0614054
      %v720 = vadd.f32 %v719, -1.4531521
      %v721 = vmul.f32 %v720, %v718
      %v722 = vadd.f32 %v721, 1.4214138
      %v723 = vmul.f32 %v722, %v718
      %v724 = vadd.f32 %v723, -0.28449672
      %v725 = vmul.f32 %v724, %v718
      %v726 = vadd.f32 %v725, 0.2548296
      %v727 = vmul.f32 %v726, %v718
      %v728 = vsub.f32 0.0, %v715
      %v729 = vmul.f32 %v728, %v715
      %v730 = vmul.f32 %v729, 1.442695
      %v731 = vpow.pop %v730
      %v732 = vmul.f32 %v727, %v731
      %v733 = vsub.f32 1.0, %v732
      %v734 = vmul.f32 %v714, %v733
      %v735 = vadd.f32 %v734, 1.0
      %v736 = vmul.f32 %v711, %v735
      %vm737 = vcmask 523264
      %738 = vst.msk [vmem:[%s402] sm:$0xff] %vm737, %v736
      %p739 = scmp.lt.s32.totalorder %s22, 1
      %s740 = scalar_select %p739, %s22, 1
      %p741 = scmp.lt.s32.totalorder %s23, 0
      %s742 = scalar_select %p741, %s23, 0
      %s743 = sadd.s32 %s742, %s740
      %s744 = smul.addr %s743, 8
      %s745 = scalar_lea.vmem %s7, %s744
      // Predicated region
      $region49: #{down2_forward.3} parent=47 // pred_check
        %p746 = pneg %p230
      $region50: #{down2_forward.3} parent=47 // pred_check_branch
        %748 = sbr.rel (%p746) target = $region52
      $region51: #{down2_forward.3} parent=47 // pred_region
        _
      $region52: #{down2_forward.3} parent=47 // pred_fallthru
        _
    $region48: #{down2_forward.3} parent=5 // pred_fallthru
      _
    %p749 = scmp.le.s32.totalorder 2, %s13
    // Predicated region
    $region53: #{down2_forward.3} parent=5 // pred_check
      %p750 = pneg %p749
    $region54: #{down2_forward.3} parent=5 // pred_check_branch
      %752 = sbr.rel (%p750) target = $region56
    $region55: #{down2_forward.3} parent=5 // pred_region
      %s753 = ssub.s32 %s13, 2
      // Predicated region
      $region57: #{down2_forward.3} parent=55 // pred_check
        %p754 = pneg %p236
      $region58: #{down2_forward.3} parent=55 // pred_check_branch
        %756 = sbr.rel (%p754) target = $region60
      $region59: #{down2_forward.3} parent=55 // pred_region
        %p757 = scmp.lt.s32.totalorder %s24, 1
        %s758 = scalar_select %p757, %s24, 1
        %p759 = scmp.lt.s32.totalorder %s25, 0
        %s760 = scalar_select %p759, %s25, 0
        %s761 = sadd.s32 %s760, %s758
        %s762 = smul.addr %s761, 8
        %s763 = scalar_lea.vmem %s7, %s762
      $region60: #{down2_forward.3} parent=55 // pred_fallthru
        _
    $region56: #{down2_forward.3} parent=5 // pred_fallthru
      _
  $region6: #{down2_forward.3} parent=0 // loop_footer
    %s17 = sadd.s32 1, %s13
  $region7: #{down2_forward.3} parent=0 // loop_footer_branch
    %12 = sbr.rel target = $region3
  $region8: #{down2_forward.3} parent=0 // loop_exit
    _

</llo_original>
